<compile_context>
chip_gen: v5e
topology: v5e:2x2
jax: 0.10.0
libtpu: 0.0.40
codegen_flags: <defaults>
</compile_context>

<pallas_src>
import functools
import math

import jax
import jax.numpy as jnp
from jax.experimental import pallas as pl
from jax.experimental.pallas import tpu as pltpu

LANE = 128  # channel dims are zero-padded to a multiple of the 128-lane vreg width


def _round_up(x, m):
    return ((x + m - 1) // m) * m


def _pad_axis_to(a, n, axis):
    if a.shape[axis] == n:
        return a
    pad = [(0, 0)] * a.ndim
    pad[axis] = (0, n - a.shape[axis])
    return jnp.pad(a, pad)


def _pick_row_tile(h_out, target=8):
    # largest divisor of h_out that is <= target (keeps the output tile bounded
    # while guaranteeing the grid covers h_out exactly)
    for t in range(min(target, h_out), 0, -1):
        if h_out % t == 0:
            return t
    return 1


# ---------------------------------------------------------------------------
# Fused kernel: grid = (batch, output-row tiles)
#   phase 1 (r == 0): expand 1x1 conv + BN bias + ReLU6 for the whole image of
#                     the current batch element into a halo-padded VMEM scratch
#   phase 2: depthwise 3x3 + BN bias + ReLU6 for this row tile (from VMEM)
#   phase 3: project 1x1 + BN bias (+ residual from the resident input block),
#            lane-dense store of the output row tile
# ---------------------------------------------------------------------------
def _inverted_residual_kernel(
        x_ref, w1_ref, b1_ref, wd_ref, b2_ref, w3_ref, b3_ref,   # inputs
        o_ref,                                                   # output
        hpad_ref,                                                # VMEM scratch
        *, stride, th_out, h_in, w_in, w_out, has_expand, use_res):
    cp = o_ref.shape[-1]
    r = pl.program_id(1)

    # ---- phase 1: fill the halo-padded hidden scratch once per batch element ----
    @pl.when(r == 0)
    def _expand():
        hpad_ref[...] = jnp.zeros(hpad_ref.shape, hpad_ref.dtype)
        if has_expand:
            xm = x_ref[...].reshape(h_in * w_in, cp).astype(jnp.bfloat16)
            hid = jnp.dot(xm, w1_ref[...], preferred_element_type=jnp.float32)
            hid = jnp.clip(hid + b1_ref[...], 0.0, 6.0)          # BN bias + ReLU6 (f32)
            hid = hid.reshape(h_in, w_in, cp)
        else:
            hid = x_ref[...].reshape(h_in, w_in, cp)
        # interior write; the zeroed border supplies the 3x3 conv padding for free
        hpad_ref[1:h_in + 1, 1:w_in + 1, :] = hid.astype(hpad_ref.dtype)

    # ---- phase 2: 3x3 depthwise conv + BN bias + ReLU6 on this row tile ----
    th_in = (th_out - 1) * stride + 3
    row0 = pl.multiple_of(r * th_out * stride, th_out * stride)
    win = hpad_ref[pl.ds(row0, th_in), :, :]                     # (th_in, W+2, cp) f32
    wd = wd_ref[...]                                             # (3, 3, cp), BN scale folded
    acc = jnp.zeros((th_out, w_out, cp), jnp.float32)
    for dy in range(3):
        for dx in range(3):
            if stride == 1:
                tap = win[dy:dy + th_out, dx:dx + w_out, :]
            else:
                # TODO(synk): stride-2 path uses strided value slices (XLU relayout);
                # a roll/BlockSpec-subsampled gather would be cheaper.
                tap = jax.lax.slice(
                    win, (dy, dx, 0),
                    (dy + (th_out - 1) * stride + 1,
                     dx + (w_out - 1) * stride + 1, cp),
                    (stride, stride, 1))
            acc = acc + tap * wd[dy, dx].reshape(1, 1, cp)
    dw = jnp.clip(acc + b2_ref[...].reshape(1, 1, cp), 0.0, 6.0)

    # ---- phase 3: 1x1 projection + BN bias (+ residual), lane-dense store ----
    y = jnp.dot(dw.reshape(th_out * w_out, cp).astype(jnp.bfloat16),
                w3_ref[...], preferred_element_type=jnp.float32)
    y = y + b3_ref[...]
    if use_res:
        xres = x_ref[:, pl.ds(row0, th_out), :, :].reshape(th_out * w_out, cp)
        y = y + xres                                             # residual stays in VMEM
    o_ref[...] = y.reshape(1, th_out, w_out, cp).astype(o_ref.dtype)


# ---------------------------------------------------------------------------
# Wrapper: NCHW in, NCHW out.
# ---------------------------------------------------------------------------
def inverted_residual_forward(x_nchw, prep, *, stride):
    n, c_in, h, w = x_nchw.shape
    cp = prep["cp"]
    oup = prep["oup"]
    has_expand = prep["has_expand"]
    use_res = (stride == 1) and (c_in == oup)

    # glue: NCHW -> NHWC, lane-dense channel padding
    x = jnp.transpose(x_nchw, (0, 2, 3, 1)).astype(jnp.float32)
    x = _pad_axis_to(x, cp, 3)

    h_out = (h - 1) // stride + 1
    w_out = (w - 1) // stride + 1
    th = _pick_row_tile(h_out)
    r_tiles = h_out // th

    kern = functools.partial(
        _inverted_residual_kernel, stride=stride, th_out=th,
        h_in=h, w_in=w, w_out=w_out, has_expand=has_expand, use_res=use_res)

    grid_spec = pltpu.PrefetchScalarGridSpec(
        num_scalar_prefetch=0,
        grid=(n, r_tiles),
        in_specs=[
            # input image: resident per batch element (block index constant in r)
            pl.BlockSpec((1, h, w, cp), lambda b, r: (b, 0, 0, 0)),
            pl.BlockSpec((cp, cp), lambda b, r: (0, 0)),       # w1 (BN folded, bf16)
            pl.BlockSpec((1, cp), lambda b, r: (0, 0)),        # b1
            pl.BlockSpec((3, 3, cp), lambda b, r: (0, 0, 0)),  # wd (BN folded, f32)
            pl.BlockSpec((1, cp), lambda b, r: (0, 0)),        # b2
            pl.BlockSpec((cp, cp), lambda b, r: (0, 0)),       # w3 (BN folded, bf16)
            pl.BlockSpec((1, cp), lambda b, r: (0, 0)),        # b3
        ],
        out_specs=pl.BlockSpec((1, th, w_out, cp), lambda b, r: (b, r, 0, 0)),
        scratch_shapes=[pltpu.VMEM((h + 2, w + 2, cp), jnp.float32)],
    )

    y = pl.pallas_call(
        kern,
        out_shape=jax.ShapeDtypeStruct((n, h_out, w_out, cp), jnp.float32),
        grid_spec=grid_spec,
        compiler_params=pltpu.CompilerParams(
            dimension_semantics=("parallel", "arbitrary"),
            vmem_limit_bytes=32 * 1024 * 1024),
    )(x, prep["w1"], prep["b1"], prep["wd"], prep["b2"], prep["w3"], prep["b3"])

    # glue: drop channel padding, NHWC -> NCHW
    return jnp.transpose(y[..., :oup], (0, 3, 1, 2))


# ---------------------------------------------------------------------------
# Parameter construction (mirrors the torch __init__ shapes) + kernel prep.
# TODO(synk): BatchNorm2d training-mode running-stat updates are not modeled;
#             BN is folded into inference-time per-channel scale/bias.
# ---------------------------------------------------------------------------
def _fold_bn(gamma, beta, mean, var, eps=1e-5):
    scale = gamma / jnp.sqrt(var + eps)
    bias = beta - mean * scale
    return scale[None, :], bias[None, :]


def make_params(key, inp, oup, expand_ratio):
    hidden = int(round(inp * expand_ratio))
    keys = jax.random.split(key, 12)
    params = {}
    i = 0
    if expand_ratio != 1:
        # torch weight (hidden, inp, 1, 1) -> stored (inp, hidden)
        params["w1"] = (jax.random.normal(keys[i], (inp, hidden), jnp.float32)
                        * math.sqrt(2.0 / inp)); i += 1
        g = 0.5 + jax.random.uniform(keys[i], (hidden,)); i += 1
        b = 0.1 * jax.random.normal(keys[i], (hidden,)); i += 1
        mu = 0.1 * jax.random.normal(keys[i], (hidden,)); i += 1
        v = 0.5 + jax.random.uniform(keys[i], (hidden,)); i += 1
        params["s1"], params["b1"] = _fold_bn(g, b, mu, v)
    # torch depthwise weight (hidden, 1, 3, 3) -> stored (3, 3, hidden)
    params["wd"] = (jax.random.normal(keys[i], (3, 3, hidden), jnp.float32)
                    * math.sqrt(2.0 / 9.0)); i += 1
    g = 0.5 + jax.random.uniform(keys[i], (hidden,)); i += 1
    b = 0.1 * jax.random.normal(keys[i], (hidden,)); i += 1
    params["s2"], params["b2"] = _fold_bn(g, b, jnp.zeros((hidden,)),
                                          jnp.ones((hidden,)))
    # torch weight (oup, hidden, 1, 1) -> stored (hidden, oup)
    params["w3"] = (jax.random.normal(keys[i], (hidden, oup), jnp.float32)
                    * math.sqrt(2.0 / hidden)); i += 1
    g = 0.5 + jax.random.uniform(keys[i], (oup,)); i += 1
    b = 0.1 * jax.random.normal(keys[i], (oup,)); i += 1
    params["s3"], params["b3"] = _fold_bn(g, b, jnp.zeros((oup,)),
                                          jnp.ones((oup,)))
    return params


def prepare_params(params, inp, oup):
    """Fold BN scale into weights, pad channels to lane width, cast MXU weights to bf16."""
    hidden = params["wd"].shape[2]
    cp = _round_up(max(inp, oup, hidden, LANE), LANE)
    prep = {"cp": cp, "oup": oup, "has_expand": "w1" in params}
    if "w1" in params:
        w1 = params["w1"] * params["s1"]                       # fold scale per out-col
        prep["w1"] = _pad_axis_to(_pad_axis_to(w1, cp, 0), cp, 1).astype(jnp.bfloat16)
        prep["b1"] = _pad_axis_to(params["b1"], cp, 1).astype(jnp.float32)
    else:
        prep["w1"] = jnp.zeros((cp, cp), jnp.bfloat16)         # unused dummies
        prep["b1"] = jnp.zeros((1, cp), jnp.float32)
    wd = params["wd"] * params["s2"].reshape(1, 1, -1)
    prep["wd"] = _pad_axis_to(wd, cp, 2).astype(jnp.float32)
    prep["b2"] = _pad_axis_to(params["b2"], cp, 1).astype(jnp.float32)
    w3 = params["w3"] * params["s3"]
    prep["w3"] = _pad_axis_to(_pad_axis_to(w3, cp, 0), cp, 1).astype(jnp.bfloat16)
    prep["b3"] = _pad_axis_to(params["b3"], cp, 1).astype(jnp.float32)
    return prep


# ---------------------------------------------------------------------------
# Pure-JAX f32 reference (lax conv) for the correctness check.
# ---------------------------------------------------------------------------
def reference_forward(x_nchw, params, *, stride):
    dn = ("NCHW", "OIHW", "NCHW")
    x = x_nchw
    if "w1" in params:
        w = jnp.transpose(params["w1"])[:, :, None, None]
        x = jax.lax.conv_general_dilated(x, w, (1, 1), "VALID",
                                         dimension_numbers=dn)
        x = x * params["s1"].reshape(1, -1, 1, 1) + params["b1"].reshape(1, -1, 1, 1)
        x = jnp.clip(x, 0.0, 6.0)
    hidden = x.shape[1]
    wd = jnp.transpose(params["wd"], (2, 0, 1))[:, None, :, :]  # (C,1,3,3)
    x = jax.lax.conv_general_dilated(x, wd, (stride, stride), ((1, 1), (1, 1)),
                                     feature_group_count=hidden,
                                     dimension_numbers=dn)
    x = x * params["s2"].reshape(1, -1, 1, 1) + params["b2"].reshape(1, -1, 1, 1)
    x = jnp.clip(x, 0.0, 6.0)
    w3 = jnp.transpose(params["w3"])[:, :, None, None]
    y = jax.lax.conv_general_dilated(x, w3, (1, 1), "VALID",
                                     dimension_numbers=dn)
    y = y * params["s3"].reshape(1, -1, 1, 1) + params["b3"].reshape(1, -1, 1, 1)
    if stride == 1 and x_nchw.shape[1] == y.shape[1]:
        y = y + x_nchw
    return y


if __name__ == "__main__":
    # InvertedResidual(inp=4, oup=4, stride=1, counter=0, expand_ratio=6)
    inp, oup, stride, expand_ratio = 4, 4, 1, 6
    N, H, W = 2, 16, 16

    key = jax.random.PRNGKey(0)
    kx, kp = jax.random.split(key)
    x = jax.random.normal(kx, (N, inp, H, W), jnp.float32)   # NCHW like PyTorch
    params = make_params(kp, inp, oup, expand_ratio)
    prep = prepare_params(params, inp, oup)

    y = inverted_residual_forward(x, prep, stride=stride)
    y = jax.block_until_ready(y)
    assert y.shape == (N, oup, H, W), y.shape

    y_ref = reference_forward(x, params, stride=stride)
    # bf16 MXU operands in the kernel -> compare against f32 reference with slack.
    if not jnp.allclose(y, y_ref, atol=1e-1, rtol=1e-1):
        err = float(jnp.max(jnp.abs(y - y_ref)))
        raise AssertionError(
            f"Pallas InvertedResidual mismatch vs JAX reference (max abs err {err})")

    print("KERNEL_OK")
</pallas_src>

<mosaic_0001>
module attributes {stable_mosaic.version = 11 : i64} {
  func.func @_inverted_residual_kernel(%arg0: i32, %arg1: i32, %arg2: memref<1x16x16x128xf32, #tpu.memory_space<vmem>>, %arg3: memref<128x128xbf16, #tpu.memory_space<vmem>>, %arg4: memref<1x128xf32, #tpu.memory_space<vmem>>, %arg5: memref<3x3x128xf32, #tpu.memory_space<vmem>>, %arg6: memref<1x128xf32, #tpu.memory_space<vmem>>, %arg7: memref<128x128xbf16, #tpu.memory_space<vmem>>, %arg8: memref<1x128xf32, #tpu.memory_space<vmem>>, %arg9: memref<1x8x16x128xf32, #tpu.memory_space<vmem>>, %arg10: memref<18x18x128xf32, #tpu.memory_space<vmem>>) attributes {dimension_semantics = [#tpu.dimension_semantics<parallel>, #tpu.dimension_semantics<arbitrary>], iteration_bounds = array<i64: 2, 2>, scalar_prefetch = 0 : i64, scratch_operands = 1 : i64, tpu.core_type = #tpu.core_type<tc>, window_params = [{transform_indices = @transform_0, window_bounds = array<i64: 1, 16, 16, 128>}, {pipeline_mode = #tpu.pipeline_mode<synchronous>, transform_indices = @transform_1, window_bounds = array<i64: 128, 128>}, {pipeline_mode = #tpu.pipeline_mode<synchronous>, transform_indices = @transform_2, window_bounds = array<i64: 1, 128>}, {pipeline_mode = #tpu.pipeline_mode<synchronous>, transform_indices = @transform_3, window_bounds = array<i64: 3, 3, 128>}, {pipeline_mode = #tpu.pipeline_mode<synchronous>, transform_indices = @transform_4, window_bounds = array<i64: 1, 128>}, {pipeline_mode = #tpu.pipeline_mode<synchronous>, transform_indices = @transform_5, window_bounds = array<i64: 128, 128>}, {pipeline_mode = #tpu.pipeline_mode<synchronous>, transform_indices = @transform_6, window_bounds = array<i64: 1, 128>}, {transform_indices = @transform_7, window_bounds = array<i64: 1, 8, 16, 128>}]} {
    %c0_i32 = arith.constant 0 : i32
    %0 = arith.cmpi eq, %arg1, %c0_i32 : i32
    %1 = arith.extui %0 : i1 to i32
    %c0_i32_0 = arith.constant 0 : i32
    %2 = arith.cmpi ne, %1, %c0_i32_0 : i32
    scf.if %2 {
      %cst_21 = arith.constant 0.000000e+00 : f32
      %94 = vector.broadcast %cst_21 : f32 to vector<18x18x128xf32>
      %c0_22 = arith.constant 0 : index
      %c0_23 = arith.constant 0 : index
      %c0_24 = arith.constant 0 : index
      %95 = vector.load %arg10[%c0_22, %c0_23, %c0_24] : memref<18x18x128xf32, #tpu.memory_space<vmem>>, vector<18x18x128xf32>
      tpu.vector_store %arg10[%c0_22, %c0_23, %c0_24], %94 {strides = array<i32>} : memref<18x18x128xf32, #tpu.memory_space<vmem>>, vector<18x18x128xf32>,
      %c0_25 = arith.constant 0 : index
      %c0_26 = arith.constant 0 : index
      %c0_27 = arith.constant 0 : index
      %c0_28 = arith.constant 0 : index
      %96 = vector.load %arg2[%c0_25, %c0_26, %c0_27, %c0_28] : memref<1x16x16x128xf32, #tpu.memory_space<vmem>>, vector<1x16x16x128xf32>
      %97 = vector.shape_cast %96 : vector<1x16x16x128xf32> to vector<256x128xf32>
      %98 = arith.truncf %97 : vector<256x128xf32> to vector<256x128xbf16>
      %c0_29 = arith.constant 0 : index
      %c0_30 = arith.constant 0 : index
      %99 = vector.load %arg3[%c0_29, %c0_30] : memref<128x128xbf16, #tpu.memory_space<vmem>>, vector<128x128xbf16>
      %cst_31 = arith.constant dense<0.000000e+00> : vector<256x128xf32>
      %100 = tpu.matmul %98, %99, %cst_31 {dimension_numbers = #tpu.dot_dimension_numbers<[1], [0], [0], [1], [0, 0, 1, 1], [], []>} : vector<256x128xbf16>, vector<128x128xbf16>, vector<256x128xf32> -> vector<256x128xf32>
      %c0_32 = arith.constant 0 : index
      %c0_33 = arith.constant 0 : index
      %101 = vector.load %arg4[%c0_32, %c0_33] : memref<1x128xf32, #tpu.memory_space<vmem>>, vector<1x128xf32>
      %102 = vector.broadcast %101 : vector<1x128xf32> to vector<256x128xf32>
      %103 = arith.addf %100, %102 : vector<256x128xf32>
      %cst_34 = arith.constant 0.000000e+00 : f32
      %cst_35 = arith.constant 6.000000e+00 : f32
      %104 = vector.broadcast %cst_34 : f32 to vector<256x128xf32>
      %105 = arith.maximumf %104, %103 : vector<256x128xf32>
      %106 = vector.broadcast %cst_35 : f32 to vector<256x128xf32>
      %107 = arith.minimumf %106, %105 : vector<256x128xf32>
      %108 = vector.shape_cast %107 : vector<256x128xf32> to vector<16x16x128xf32>
      %c1 = arith.constant 1 : index
      %c1_36 = arith.constant 1 : index
      %c0_37 = arith.constant 0 : index
      %109 = vector.load %arg10[%c1, %c1_36, %c0_37] : memref<18x18x128xf32, #tpu.memory_space<vmem>>, vector<16x16x128xf32>
      tpu.vector_store %arg10[%c1, %c1_36, %c0_37], %108 {strides = array<i32>} : memref<18x18x128xf32, #tpu.memory_space<vmem>>, vector<16x16x128xf32>,
    } else {
    }
    %c8_i32 = arith.constant 8 : i32
    %3 = arith.muli %arg1, %c8_i32 : i32
    %c1_i32 = arith.constant 1 : i32
    %4 = arith.muli %3, %c1_i32 : i32
    %5 = tpu.assume_multiple %4, 8 : i32
    %6 = arith.index_cast %5 : i32 to index
    %c0 = arith.constant 0 : index
    %c0_1 = arith.constant 0 : index
    %7 = vector.load %arg10[%6, %c0, %c0_1] : memref<18x18x128xf32, #tpu.memory_space<vmem>>, vector<10x18x128xf32>
    %c0_2 = arith.constant 0 : index
    %c0_3 = arith.constant 0 : index
    %c0_4 = arith.constant 0 : index
    %8 = vector.load %arg5[%c0_2, %c0_3, %c0_4] : memref<3x3x128xf32, #tpu.memory_space<vmem>>, vector<3x3x128xf32>
    %cst = arith.constant 0.000000e+00 : f32
    %9 = vector.broadcast %cst : f32 to vector<8x16x128xf32>
    %10 = vector.extract_strided_slice %7 {offsets = [0, 0, 0], sizes = [8, 16, 128], strides = [1, 1, 1]} : vector<10x18x128xf32> to vector<8x16x128xf32>
    %11 = vector.extract_strided_slice %8 {offsets = [0, 0, 0], sizes = [1, 1, 128], strides = [1, 1, 1]} : vector<3x3x128xf32> to vector<1x1x128xf32>
    %12 = vector.shape_cast %11 : vector<1x1x128xf32> to vector<128xf32>
    %13 = vector.shape_cast %12 : vector<128xf32> to vector<1x1x128xf32>
    %14 = vector.broadcast %13 : vector<1x1x128xf32> to vector<8x16x128xf32>
    %15 = arith.mulf %10, %14 : vector<8x16x128xf32>
    %16 = arith.addf %9, %15 : vector<8x16x128xf32>
    %17 = vector.extract_strided_slice %7 {offsets = [0, 1, 0], sizes = [8, 16, 128], strides = [1, 1, 1]} : vector<10x18x128xf32> to vector<8x16x128xf32>
    %18 = vector.extract_strided_slice %8 {offsets = [0, 1, 0], sizes = [1, 1, 128], strides = [1, 1, 1]} : vector<3x3x128xf32> to vector<1x1x128xf32>
    %19 = vector.shape_cast %18 : vector<1x1x128xf32> to vector<128xf32>
    %20 = vector.shape_cast %19 : vector<128xf32> to vector<1x1x128xf32>
    %21 = vector.broadcast %20 : vector<1x1x128xf32> to vector<8x16x128xf32>
    %22 = arith.mulf %17, %21 : vector<8x16x128xf32>
    %23 = arith.addf %16, %22 : vector<8x16x128xf32>
    %24 = vector.extract_strided_slice %7 {offsets = [0, 2, 0], sizes = [8, 16, 128], strides = [1, 1, 1]} : vector<10x18x128xf32> to vector<8x16x128xf32>
    %25 = vector.extract_strided_slice %8 {offsets = [0, 2, 0], sizes = [1, 1, 128], strides = [1, 1, 1]} : vector<3x3x128xf32> to vector<1x1x128xf32>
    %26 = vector.shape_cast %25 : vector<1x1x128xf32> to vector<128xf32>
    %27 = vector.shape_cast %26 : vector<128xf32> to vector<1x1x128xf32>
    %28 = vector.broadcast %27 : vector<1x1x128xf32> to vector<8x16x128xf32>
    %29 = arith.mulf %24, %28 : vector<8x16x128xf32>
    %30 = arith.addf %23, %29 : vector<8x16x128xf32>
    %31 = vector.extract_strided_slice %7 {offsets = [1, 0, 0], sizes = [8, 16, 128], strides = [1, 1, 1]} : vector<10x18x128xf32> to vector<8x16x128xf32>
    %32 = vector.extract_strided_slice %8 {offsets = [1, 0, 0], sizes = [1, 1, 128], strides = [1, 1, 1]} : vector<3x3x128xf32> to vector<1x1x128xf32>
    %33 = vector.shape_cast %32 : vector<1x1x128xf32> to vector<128xf32>
    %34 = vector.shape_cast %33 : vector<128xf32> to vector<1x1x128xf32>
    %35 = vector.broadcast %34 : vector<1x1x128xf32> to vector<8x16x128xf32>
    %36 = arith.mulf %31, %35 : vector<8x16x128xf32>
    %37 = arith.addf %30, %36 : vector<8x16x128xf32>
    %38 = vector.extract_strided_slice %7 {offsets = [1, 1, 0], sizes = [8, 16, 128], strides = [1, 1, 1]} : vector<10x18x128xf32> to vector<8x16x128xf32>
    %39 = vector.extract_strided_slice %8 {offsets = [1, 1, 0], sizes = [1, 1, 128], strides = [1, 1, 1]} : vector<3x3x128xf32> to vector<1x1x128xf32>
    %40 = vector.shape_cast %39 : vector<1x1x128xf32> to vector<128xf32>
    %41 = vector.shape_cast %40 : vector<128xf32> to vector<1x1x128xf32>
    %42 = vector.broadcast %41 : vector<1x1x128xf32> to vector<8x16x128xf32>
    %43 = arith.mulf %38, %42 : vector<8x16x128xf32>
    %44 = arith.addf %37, %43 : vector<8x16x128xf32>
    %45 = vector.extract_strided_slice %7 {offsets = [1, 2, 0], sizes = [8, 16, 128], strides = [1, 1, 1]} : vector<10x18x128xf32> to vector<8x16x128xf32>
    %46 = vector.extract_strided_slice %8 {offsets = [1, 2, 0], sizes = [1, 1, 128], strides = [1, 1, 1]} : vector<3x3x128xf32> to vector<1x1x128xf32>
    %47 = vector.shape_cast %46 : vector<1x1x128xf32> to vector<128xf32>
    %48 = vector.shape_cast %47 : vector<128xf32> to vector<1x1x128xf32>
    %49 = vector.broadcast %48 : vector<1x1x128xf32> to vector<8x16x128xf32>
    %50 = arith.mulf %45, %49 : vector<8x16x128xf32>
    %51 = arith.addf %44, %50 : vector<8x16x128xf32>
    %52 = vector.extract_strided_slice %7 {offsets = [2, 0, 0], sizes = [8, 16, 128], strides = [1, 1, 1]} : vector<10x18x128xf32> to vector<8x16x128xf32>
    %53 = vector.extract_strided_slice %8 {offsets = [2, 0, 0], sizes = [1, 1, 128], strides = [1, 1, 1]} : vector<3x3x128xf32> to vector<1x1x128xf32>
    %54 = vector.shape_cast %53 : vector<1x1x128xf32> to vector<128xf32>
    %55 = vector.shape_cast %54 : vector<128xf32> to vector<1x1x128xf32>
    %56 = vector.broadcast %55 : vector<1x1x128xf32> to vector<8x16x128xf32>
    %57 = arith.mulf %52, %56 : vector<8x16x128xf32>
    %58 = arith.addf %51, %57 : vector<8x16x128xf32>
    %59 = vector.extract_strided_slice %7 {offsets = [2, 1, 0], sizes = [8, 16, 128], strides = [1, 1, 1]} : vector<10x18x128xf32> to vector<8x16x128xf32>
    %60 = vector.extract_strided_slice %8 {offsets = [2, 1, 0], sizes = [1, 1, 128], strides = [1, 1, 1]} : vector<3x3x128xf32> to vector<1x1x128xf32>
    %61 = vector.shape_cast %60 : vector<1x1x128xf32> to vector<128xf32>
    %62 = vector.shape_cast %61 : vector<128xf32> to vector<1x1x128xf32>
    %63 = vector.broadcast %62 : vector<1x1x128xf32> to vector<8x16x128xf32>
    %64 = arith.mulf %59, %63 : vector<8x16x128xf32>
    %65 = arith.addf %58, %64 : vector<8x16x128xf32>
    %66 = vector.extract_strided_slice %7 {offsets = [2, 2, 0], sizes = [8, 16, 128], strides = [1, 1, 1]} : vector<10x18x128xf32> to vector<8x16x128xf32>
    %67 = vector.extract_strided_slice %8 {offsets = [2, 2, 0], sizes = [1, 1, 128], strides = [1, 1, 1]} : vector<3x3x128xf32> to vector<1x1x128xf32>
    %68 = vector.shape_cast %67 : vector<1x1x128xf32> to vector<128xf32>
    %69 = vector.shape_cast %68 : vector<128xf32> to vector<1x1x128xf32>
    %70 = vector.broadcast %69 : vector<1x1x128xf32> to vector<8x16x128xf32>
    %71 = arith.mulf %66, %70 : vector<8x16x128xf32>
    %72 = arith.addf %65, %71 : vector<8x16x128xf32>
    %c0_5 = arith.constant 0 : index
    %c0_6 = arith.constant 0 : index
    %73 = vector.load %arg6[%c0_5, %c0_6] : memref<1x128xf32, #tpu.memory_space<vmem>>, vector<1x128xf32>
    %74 = vector.shape_cast %73 : vector<1x128xf32> to vector<1x1x128xf32>
    %75 = vector.broadcast %74 : vector<1x1x128xf32> to vector<8x16x128xf32>
    %76 = arith.addf %72, %75 : vector<8x16x128xf32>
    %cst_7 = arith.constant 0.000000e+00 : f32
    %cst_8 = arith.constant 6.000000e+00 : f32
    %77 = vector.broadcast %cst_7 : f32 to vector<8x16x128xf32>
    %78 = arith.maximumf %77, %76 : vector<8x16x128xf32>
    %79 = vector.broadcast %cst_8 : f32 to vector<8x16x128xf32>
    %80 = arith.minimumf %79, %78 : vector<8x16x128xf32>
    %81 = vector.shape_cast %80 : vector<8x16x128xf32> to vector<128x128xf32>
    %82 = arith.truncf %81 : vector<128x128xf32> to vector<128x128xbf16>
    %c0_9 = arith.constant 0 : index
    %c0_10 = arith.constant 0 : index
    %83 = vector.load %arg7[%c0_9, %c0_10] : memref<128x128xbf16, #tpu.memory_space<vmem>>, vector<128x128xbf16>
    %cst_11 = arith.constant dense<0.000000e+00> : vector<128x128xf32>
    %84 = tpu.matmul %82, %83, %cst_11 {dimension_numbers = #tpu.dot_dimension_numbers<[1], [0], [0], [1], [0, 0, 1, 1], [], []>} : vector<128x128xbf16>, vector<128x128xbf16>, vector<128x128xf32> -> vector<128x128xf32>
    %c0_12 = arith.constant 0 : index
    %c0_13 = arith.constant 0 : index
    %85 = vector.load %arg8[%c0_12, %c0_13] : memref<1x128xf32, #tpu.memory_space<vmem>>, vector<1x128xf32>
    %86 = vector.broadcast %85 : vector<1x128xf32> to vector<128x128xf32>
    %87 = arith.addf %84, %86 : vector<128x128xf32>
    %c0_14 = arith.constant 0 : index
    %88 = arith.index_cast %5 : i32 to index
    %c0_15 = arith.constant 0 : index
    %c0_16 = arith.constant 0 : index
    %89 = vector.load %arg2[%c0_14, %88, %c0_15, %c0_16] : memref<1x16x16x128xf32, #tpu.memory_space<vmem>>, vector<1x8x16x128xf32>
    %90 = vector.shape_cast %89 : vector<1x8x16x128xf32> to vector<128x128xf32>
    %91 = arith.addf %87, %90 : vector<128x128xf32>
    %92 = vector.shape_cast %91 : vector<128x128xf32> to vector<1x8x16x128xf32>
    %c0_17 = arith.constant 0 : index
    %c0_18 = arith.constant 0 : index
    %c0_19 = arith.constant 0 : index
    %c0_20 = arith.constant 0 : index
    %93 = vector.load %arg9[%c0_17, %c0_18, %c0_19, %c0_20] : memref<1x8x16x128xf32, #tpu.memory_space<vmem>>, vector<1x8x16x128xf32>
    tpu.vector_store %arg9[%c0_17, %c0_18, %c0_19, %c0_20], %92 {strides = array<i32>} : memref<1x8x16x128xf32, #tpu.memory_space<vmem>>, vector<1x8x16x128xf32>,
    return
  }
  func.func @transform_0(%arg0: i32, %arg1: i32) -> (i32, i32, i32, i32) {
    %c0_i32 = arith.constant 0 : i32
    %c0_i32_0 = arith.constant 0 : i32
    %c0_i32_1 = arith.constant 0 : i32
    %c0_i32_2 = arith.constant 0 : i32
    return %arg0, %c0_i32, %c0_i32_0, %c0_i32_1 : i32, i32, i32, i32
  }
  func.func @transform_1(%arg0: i32, %arg1: i32) -> (i32, i32) {
    %c0_i32 = arith.constant 0 : i32
    %c0_i32_0 = arith.constant 0 : i32
    %c0_i32_1 = arith.constant 0 : i32
    return %c0_i32, %c0_i32_0 : i32, i32
  }
  func.func @transform_2(%arg0: i32, %arg1: i32) -> (i32, i32) {
    %c0_i32 = arith.constant 0 : i32
    %c0_i32_0 = arith.constant 0 : i32
    %c0_i32_1 = arith.constant 0 : i32
    return %c0_i32, %c0_i32_0 : i32, i32
  }
  func.func @transform_3(%arg0: i32, %arg1: i32) -> (i32, i32, i32) {
    %c0_i32 = arith.constant 0 : i32
    %c0_i32_0 = arith.constant 0 : i32
    %c0_i32_1 = arith.constant 0 : i32
    %c0_i32_2 = arith.constant 0 : i32
    return %c0_i32, %c0_i32_0, %c0_i32_1 : i32, i32, i32
  }
  func.func @transform_4(%arg0: i32, %arg1: i32) -> (i32, i32) {
    %c0_i32 = arith.constant 0 : i32
    %c0_i32_0 = arith.constant 0 : i32
    %c0_i32_1 = arith.constant 0 : i32
    return %c0_i32, %c0_i32_0 : i32, i32
  }
  func.func @transform_5(%arg0: i32, %arg1: i32) -> (i32, i32) {
    %c0_i32 = arith.constant 0 : i32
    %c0_i32_0 = arith.constant 0 : i32
    %c0_i32_1 = arith.constant 0 : i32
    return %c0_i32, %c0_i32_0 : i32, i32
  }
  func.func @transform_6(%arg0: i32, %arg1: i32) -> (i32, i32) {
    %c0_i32 = arith.constant 0 : i32
    %c0_i32_0 = arith.constant 0 : i32
    %c0_i32_1 = arith.constant 0 : i32
    return %c0_i32, %c0_i32_0 : i32, i32
  }
  func.func @transform_7(%arg0: i32, %arg1: i32) -> (i32, i32, i32, i32) {
    %c0_i32 = arith.constant 0 : i32
    %c0_i32_0 = arith.constant 0 : i32
    %c0_i32_1 = arith.constant 0 : i32
    return %arg0, %arg1, %c0_i32, %c0_i32_0 : i32, i32, i32, i32
  }
}

</mosaic_0001>

<llo_original>
// kernel: tpu_custom_call.1
$region0: #{tpu_custom_call.1}
  #allocation0 [shape = 'u32[]', space=smem, size = 0x4, offset = 0x4, fixed_abs, tag = 'smem constant byte address 0x4 - core index']
  #allocation1 [shape = 'u32[72,128]{1,0:T(1,128)}', space=vmem, size = 0x9000, scoped, tag = 'internal scratch']
  #allocation2 [shape = 'f32[18,18,128]{2,1,0:T(8,128)}', space=vmem, size = 0x36000, scoped, tag = 'scratch operand']
  %s0 = inlined_call_operand.hbm [shape: f32[2,16,16,128], index: 0, kind: input, shape index: {}]
  %s1 = inlined_call_operand.hbm [shape: bf16[128,128], index: 1, kind: input, shape index: {}]
  %s2 = inlined_call_operand.vmem [shape: f32[1,128], index: 2, kind: input, shape index: {}]
  %s3 = inlined_call_operand.hbm [shape: f32[3,3,128], index: 3, kind: input, shape index: {}]
  %s4 = inlined_call_operand.vmem [shape: f32[1,128], index: 4, kind: input, shape index: {}]
  %s5 = inlined_call_operand.hbm [shape: bf16[128,128], index: 5, kind: input, shape index: {}]
  %s6 = inlined_call_operand.vmem [shape: f32[1,128], index: 6, kind: input, shape index: {}]
  %s7 = inlined_call_operand.hbm [shape: f32[2,16,16,128], index: 7, kind: output, shape index: {}]
  %s8 = sld [smem:[#allocation0]]
  $region81: #{tpu_custom_call.1} parent=0
    _
  %s10 = ssub.s32 1, %s8
  %s11 = scalar_select 0, %s10, %s8
  $region1: #{tpu_custom_call.1} parent=0
    #allocation3 [shape = 'u8[262144]{0}', space=vmem, size = 0x40000, scoped, tag = 'input window, operand 0']
    #allocation4 [shape = 's32[2]{0}', space=sflag, size = 0x8, scoped, tag = 'scoped memory for tpu_custom_call.1']
    #allocation5 [shape = 's32[2]{0}', space=sflag, size = 0x8, scoped, tag = 'scoped memory for tpu_custom_call.1']
    #allocation6 [shape = 'u8[32768]{0}', space=vmem, size = 0x8000, scoped, tag = 'input window, operand 1, single buffered']
    #allocation7 [shape = 's32[1]{0}', space=sflag, size = 0x4, scoped, tag = 'scoped memory for tpu_custom_call.1']
    #allocation8 [shape = 'u8[6144]{0}', space=vmem, size = 0x1800, scoped, tag = 'input window, operand 3, single buffered']
    #allocation9 [shape = 'u8[32768]{0}', space=vmem, size = 0x8000, scoped, tag = 'input window, operand 5, single buffered']
    #allocation10 [shape = 's32[1]{0}', space=sflag, size = 0x4, scoped, tag = 'scoped memory for tpu_custom_call.1']
    #allocation11 [shape = 'u8[131072]{0}', space=vmem, size = 0x20000, scoped, tag = 'output window, operand 0']
    %12 = vsyncpa [#allocation4], 0
    %s13 = scalar_lea.sflag [#allocation4], 1
    %14 = vsyncpa %s13, 0
    %15 = vsyncpa [#allocation7], 0
    %16 = vsyncpa [#allocation10], 0
    %17 = vsyncpa [#allocation5], 0
    %s18 = scalar_lea.sflag [#allocation5], 1
    %19 = vsyncpa %s18, 0
    loop: start=0, step=1, limit=6
    $region2: #{tpu_custom_call.1} parent=1 // loop_pre_header
      _
    $region3: #{tpu_custom_call.1} parent=1 // loop_header
      %s21 = sphi 0, %s25
      %p22 = scmp.ge.s32.totalorder %s21, 6
      %s28 = sphi 0, %s40
      %s29 = sphi 0, %s36
      %s30 = sphi 0, %s28
      %s31 = sphi 0, %s29
      %s32 = sphi 0, %s30
      %s33 = sphi 0, %s31
      %s43 = sphi 0, %s45
      %s46 = sphi 0, %s43
      %s47 = sphi 0, %s46
      %s63 = sphi 0, %s47
      %s67 = sphi 0, %s67
      %s69 = sphi 0, %s67
      %s70 = sphi 0, %s69
      %s84 = sphi 0, %s70
      %s88 = sphi 0, %s88
      %s90 = sphi 0, %s88
      %s91 = sphi 0, %s90
      %s105 = sphi 0, %s91
      %s109 = sphi 0, %s109
      %s111 = sphi 0, %s109
      %s112 = sphi 0, %s111
      %s126 = sphi 0, %s112
      %s130 = sphi 0, %s130
      %s132 = sphi 0, %s130
      %s133 = sphi 0, %s132
      %s147 = sphi 0, %s133
      %s151 = sphi 0, %s151
      %s153 = sphi 0, %s151
      %s154 = sphi 0, %s153
      %s168 = sphi 0, %s154
      %s172 = sphi 0, %s172
      %s174 = sphi 0, %s172
      %s175 = sphi 0, %s174
      %s189 = sphi 0, %s175
      %s197 = sphi 0, %s199
      %s200 = sphi 0, %s197
      %s201 = sphi 0, %s200
      %s217 = sphi 0, %s201
    $region4: #{tpu_custom_call.1} parent=1 // loop_header_branch
      %24 = sbr.rel (%p22) target = $region8
    $region5: #{tpu_custom_call.1} parent=1 // loop_body
      %s26 = ssub.s32 %s21, 1
      %s27 = ssub.s32 %s21, 2
      %s34 = sadd.s32 1, %s29
      %p35 = scmp.ge.s32.totalorder %s34, 2
      %s36 = scalar_select %p35, 0, %s34
      %s37 = sadd.s32 1, %s28
      %s38 = scalar_select %p35, %s37, %s28
      %p39 = scmp.ge.s32.totalorder %s38, 2
      %s40 = scalar_select %p39, 0, %s38
      %s41 = ssub.s32 %s28, %s40
      %p42 = scmp.eq.s32.totalorder %s41, 0
      %s44 = sadd.s32 %s43, 1
      %s45 = scalar_select %p42, %s43, %s44
      %p48 = pneg %p42
      %p49 = scmp.eq.s32.totalorder %s21, 3
      %p50 = por %p48, %p49
      %p51 = scmp.ne.s32.totalorder %s43, %s46
      %p52 = scmp.eq.s32.totalorder %s21, 0
      %p53 = por %p51, %p52
      %p54 = scmp.ne.s32.totalorder %s43, %s46
      %p55 = scmp.eq.s32.totalorder %s26, 3
      %p56 = por %p54, %p55
      %p57 = scmp.ne.s32.totalorder %s46, %s47
      %p58 = scmp.eq.s32.totalorder %s26, 0
      %p59 = por %p57, %p58
      %p60 = scmp.ne.s32.totalorder %s46, %s47
      %p61 = scmp.eq.s32.totalorder %s27, 3
      %p62 = por %p60, %p61
      %p64 = scmp.ne.s32.totalorder %s47, %s63
      %p65 = scmp.eq.s32.totalorder %s27, 0
      %p66 = por %p64, %p65
      %s68 = sadd.s32 %s67, 1
      %p71 = scmp.eq.s32.totalorder %s21, 3
      %p72 = scmp.ne.s32.totalorder %s67, %s69
      %p73 = scmp.eq.s32.totalorder %s21, 0
      %p74 = por %p72, %p73
      %p75 = scmp.ne.s32.totalorder %s67, %s69
      %p76 = scmp.eq.s32.totalorder %s26, 3
      %p77 = por %p75, %p76
      %p78 = scmp.ne.s32.totalorder %s69, %s70
      %p79 = scmp.eq.s32.totalorder %s26, 0
      %p80 = por %p78, %p79
      %p81 = scmp.ne.s32.totalorder %s69, %s70
      %p82 = scmp.eq.s32.totalorder %s27, 3
      %p83 = por %p81, %p82
      %p85 = scmp.ne.s32.totalorder %s70, %s84
      %p86 = scmp.eq.s32.totalorder %s27, 0
      %p87 = por %p85, %p86
      %s89 = sadd.s32 %s88, 1
      %p92 = scmp.eq.s32.totalorder %s21, 3
      %p93 = scmp.ne.s32.totalorder %s88, %s90
      %p94 = scmp.eq.s32.totalorder %s21, 0
      %p95 = por %p93, %p94
      %p96 = scmp.ne.s32.totalorder %s88, %s90
      %p97 = scmp.eq.s32.totalorder %s26, 3
      %p98 = por %p96, %p97
      %p99 = scmp.ne.s32.totalorder %s90, %s91
      %p100 = scmp.eq.s32.totalorder %s26, 0
      %p101 = por %p99, %p100
      %p102 = scmp.ne.s32.totalorder %s90, %s91
      %p103 = scmp.eq.s32.totalorder %s27, 3
      %p104 = por %p102, %p103
      %p106 = scmp.ne.s32.totalorder %s91, %s105
      %p107 = scmp.eq.s32.totalorder %s27, 0
      %p108 = por %p106, %p107
      %s110 = sadd.s32 %s109, 1
      %p113 = scmp.eq.s32.totalorder %s21, 3
      %p114 = scmp.ne.s32.totalorder %s109, %s111
      %p115 = scmp.eq.s32.totalorder %s21, 0
      %p116 = por %p114, %p115
      %p117 = scmp.ne.s32.totalorder %s109, %s111
      %p118 = scmp.eq.s32.totalorder %s26, 3
      %p119 = por %p117, %p118
      %p120 = scmp.ne.s32.totalorder %s111, %s112
      %p121 = scmp.eq.s32.totalorder %s26, 0
      %p122 = por %p120, %p121
      %p123 = scmp.ne.s32.totalorder %s111, %s112
      %p124 = scmp.eq.s32.totalorder %s27, 3
      %p125 = por %p123, %p124
      %p127 = scmp.ne.s32.totalorder %s112, %s126
      %p128 = scmp.eq.s32.totalorder %s27, 0
      %p129 = por %p127, %p128
      %s131 = sadd.s32 %s130, 1
      %p134 = scmp.eq.s32.totalorder %s21, 3
      %p135 = scmp.ne.s32.totalorder %s130, %s132
      %p136 = scmp.eq.s32.totalorder %s21, 0
      %p137 = por %p135, %p136
      %p138 = scmp.ne.s32.totalorder %s130, %s132
      %p139 = scmp.eq.s32.totalorder %s26, 3
      %p140 = por %p138, %p139
      %p141 = scmp.ne.s32.totalorder %s132, %s133
      %p142 = scmp.eq.s32.totalorder %s26, 0
      %p143 = por %p141, %p142
      %p144 = scmp.ne.s32.totalorder %s132, %s133
      %p145 = scmp.eq.s32.totalorder %s27, 3
      %p146 = por %p144, %p145
      %p148 = scmp.ne.s32.totalorder %s133, %s147
      %p149 = scmp.eq.s32.totalorder %s27, 0
      %p150 = por %p148, %p149
      %s152 = sadd.s32 %s151, 1
      %p155 = scmp.eq.s32.totalorder %s21, 3
      %p156 = scmp.ne.s32.totalorder %s151, %s153
      %p157 = scmp.eq.s32.totalorder %s21, 0
      %p158 = por %p156, %p157
      %p159 = scmp.ne.s32.totalorder %s151, %s153
      %p160 = scmp.eq.s32.totalorder %s26, 3
      %p161 = por %p159, %p160
      %p162 = scmp.ne.s32.totalorder %s153, %s154
      %p163 = scmp.eq.s32.totalorder %s26, 0
      %p164 = por %p162, %p163
      %p165 = scmp.ne.s32.totalorder %s153, %s154
      %p166 = scmp.eq.s32.totalorder %s27, 3
      %p167 = por %p165, %p166
      %p169 = scmp.ne.s32.totalorder %s154, %s168
      %p170 = scmp.eq.s32.totalorder %s27, 0
      %p171 = por %p169, %p170
      %s173 = sadd.s32 %s172, 1
      %p176 = scmp.eq.s32.totalorder %s21, 3
      %p177 = scmp.ne.s32.totalorder %s172, %s174
      %p178 = scmp.eq.s32.totalorder %s21, 0
      %p179 = por %p177, %p178
      %p180 = scmp.ne.s32.totalorder %s172, %s174
      %p181 = scmp.eq.s32.totalorder %s26, 3
      %p182 = por %p180, %p181
      %p183 = scmp.ne.s32.totalorder %s174, %s175
      %p184 = scmp.eq.s32.totalorder %s26, 0
      %p185 = por %p183, %p184
      %p186 = scmp.ne.s32.totalorder %s174, %s175
      %p187 = scmp.eq.s32.totalorder %s27, 3
      %p188 = por %p186, %p187
      %p190 = scmp.ne.s32.totalorder %s175, %s189
      %p191 = scmp.eq.s32.totalorder %s27, 0
      %p192 = por %p190, %p191
      %s193 = ssub.s32 %s28, %s40
      %s194 = ssub.s32 %s29, %s36
      %s195 = sor.u32 %s193, %s194
      %p196 = scmp.eq.s32.totalorder %s195, 0
      %s198 = sadd.s32 %s197, 1
      %s199 = scalar_select %p196, %s197, %s198
      %p202 = pneg %p196
      %p203 = scmp.eq.s32.totalorder %s21, 3
      %p204 = por %p202, %p203
      %p205 = scmp.ne.s32.totalorder %s197, %s200
      %p206 = scmp.eq.s32.totalorder %s21, 0
      %p207 = por %p205, %p206
      %p208 = scmp.ne.s32.totalorder %s197, %s200
      %p209 = scmp.eq.s32.totalorder %s26, 3
      %p210 = por %p208, %p209
      %p211 = scmp.ne.s32.totalorder %s200, %s201
      %p212 = scmp.eq.s32.totalorder %s26, 0
      %p213 = por %p211, %p212
      %p214 = scmp.ne.s32.totalorder %s200, %s201
      %p215 = scmp.eq.s32.totalorder %s27, 3
      %p216 = por %p214, %p215
      %p218 = scmp.ne.s32.totalorder %s201, %s217
      %p219 = scmp.eq.s32.totalorder %s27, 0
      %p220 = por %p218, %p219
      %p221 = scmp.le.s32.totalorder 1, %s21
      %p222 = scmp.lt.s32.totalorder %s21, 5
      %p223 = pnand %p221, %p222
      %p224 = pneg %p223
      // Predicated region
      $region9: #{tpu_custom_call.1} parent=5 // pred_check
        _
      $region10: #{tpu_custom_call.1} parent=5 // pred_check_branch
        %226 = sbr.rel (%p223) target = $region12
      $region11: #{tpu_custom_call.1} parent=5 // pred_region
        %s227 = ssub.s32 %s21, 1
        // Predicated region
        $region13: #{tpu_custom_call.1} parent=11 // pred_check
          %p228 = pneg %p80
        $region14: #{tpu_custom_call.1} parent=11 // pred_check_branch
          %230 = sbr.rel (%p228) target = $region16
        $region15: #{tpu_custom_call.1} parent=11 // pred_region
          %232 = vsyncadd [#allocation7], 0
          %s233 = sshll.u32 %s1, 4
          %s234 = int_to_ptr.hbm [resolvable:$true] %s233
          %s235 = sshll.u32 [#allocation6], 4
          %s236 = int_to_ptr.vmem [resolvable:$true] %s235
          %241 = dma.hbm_to_vmem [thread:$0]  %s234, 1024, %s236, [#allocation7], 64, 64, 4
        $region16: #{tpu_custom_call.1} parent=11 // pred_fallthru
          _
        // Predicated region
        $region17: #{tpu_custom_call.1} parent=11 // pred_check
          %p242 = pneg %p101
        $region18: #{tpu_custom_call.1} parent=11 // pred_check_branch
          %244 = sbr.rel (%p242) target = $region20
        $region19: #{tpu_custom_call.1} parent=11 // pred_region
          _
        $region20: #{tpu_custom_call.1} parent=11 // pred_fallthru
          _
        // Predicated region
        $region21: #{tpu_custom_call.1} parent=11 // pred_check
          %p245 = pneg %p122
        $region22: #{tpu_custom_call.1} parent=11 // pred_check_branch
          %247 = sbr.rel (%p245) target = $region24
        $region23: #{tpu_custom_call.1} parent=11 // pred_region
          %249 = vsyncadd [#allocation7], 0
          %s250 = sshll.u32 %s3, 4
          %s251 = int_to_ptr.hbm [resolvable:$true] %s250
          %s252 = sshll.u32 [#allocation8], 4
          %s253 = int_to_ptr.vmem [resolvable:$true] %s252
          %258 = dma.hbm_to_vmem [thread:$0]  %s251, 192, %s253, [#allocation7], 64, 64, 4
        $region24: #{tpu_custom_call.1} parent=11 // pred_fallthru
          _
        // Predicated region
        $region25: #{tpu_custom_call.1} parent=11 // pred_check
          %p259 = pneg %p143
        $region26: #{tpu_custom_call.1} parent=11 // pred_check_branch
          %261 = sbr.rel (%p259) target = $region28
        $region27: #{tpu_custom_call.1} parent=11 // pred_region
          _
        $region28: #{tpu_custom_call.1} parent=11 // pred_fallthru
          _
        // Predicated region
        $region29: #{tpu_custom_call.1} parent=11 // pred_check
          %p262 = pneg %p164
        $region30: #{tpu_custom_call.1} parent=11 // pred_check_branch
          %264 = sbr.rel (%p262) target = $region32
        $region31: #{tpu_custom_call.1} parent=11 // pred_region
          %266 = vsyncadd [#allocation10], 0
          %s267 = sshll.u32 %s5, 4
          %s268 = int_to_ptr.hbm [resolvable:$true] %s267
          %s269 = sshll.u32 [#allocation9], 4
          %s270 = int_to_ptr.vmem [resolvable:$true] %s269
          %275 = dma.hbm_to_vmem [thread:$0]  %s268, 1024, %s270, [#allocation10], 64, 64, 4
        $region32: #{tpu_custom_call.1} parent=11 // pred_fallthru
          _
        // Predicated region
        $region33: #{tpu_custom_call.1} parent=11 // pred_check
          %p276 = pneg %p185
        $region34: #{tpu_custom_call.1} parent=11 // pred_check_branch
          %278 = sbr.rel (%p276) target = $region36
        $region35: #{tpu_custom_call.1} parent=11 // pred_region
          _
        $region36: #{tpu_custom_call.1} parent=11 // pred_fallthru
          _
      $region12: #{tpu_custom_call.1} parent=5 // pred_fallthru
        _
      %p279 = scmp.lt.s32.totalorder %s21, 4
      // Predicated region
      $region37: #{tpu_custom_call.1} parent=5 // pred_check
        %p280 = pneg %p279
      $region38: #{tpu_custom_call.1} parent=5 // pred_check_branch
        %282 = sbr.rel (%p280) target = $region40
      $region39: #{tpu_custom_call.1} parent=5 // pred_region
        // Predicated region
        $region41: #{tpu_custom_call.1} parent=39 // pred_check
          %p283 = pneg %p53
        $region42: #{tpu_custom_call.1} parent=39 // pred_check_branch
          %285 = sbr.rel (%p283) target = $region44
        $region43: #{tpu_custom_call.1} parent=39 // pred_region
          %s286 = sand.u32 %s43, 1
          %s287 = scalar_lea.sflag [#allocation4], %s286
          %s288 = sand.u32 %s43, 1
          %s289 = smul.addr %s288, 256
          %s290 = scalar_lea.vmem [#allocation3], %s289
          %292 = vsyncadd %s287, 0
          %s293 = smul.addr %s28, 32
          %s294 = smul.addr %s293, 8
          %s295 = scalar_lea.hbm %s0, %s294
          %s296 = sshll.u32 %s295, 4
          %s297 = int_to_ptr.hbm [resolvable:$true] %s296
          %s298 = sshll.u32 %s290, 4
          %s299 = int_to_ptr.vmem [resolvable:$true] %s298
          %304 = dma.hbm_to_vmem [thread:$0]  %s297, 4096, %s299, %s287, 128, 128, 8
        $region44: #{tpu_custom_call.1} parent=39 // pred_fallthru
          _
      $region40: #{tpu_custom_call.1} parent=5 // pred_fallthru
        _
      %p305 = scmp.le.s32.totalorder 1, %s21
      %p306 = scmp.lt.s32.totalorder %s21, 5
      %p307 = pnand %p305, %p306
      %p308 = pneg %p307
      // Predicated region
      $region45: #{tpu_custom_call.1} parent=5 // pred_check
        _
      $region46: #{tpu_custom_call.1} parent=5 // pred_check_branch
        %310 = sbr.rel (%p307) target = $region48
      $region47: #{tpu_custom_call.1} parent=5 // pred_region
        %s311 = ssub.s32 %s21, 1
        %s312 = sand.u32 %s46, 1
        %s313 = scalar_lea.sflag [#allocation4], %s312
        %s314 = sand.u32 %s46, 1
        %s315 = smul.addr %s314, 256
        %s316 = scalar_lea.vmem [#allocation3], %s315
        // Predicated region
        $region49: #{tpu_custom_call.1} parent=47 // pred_check
          %p317 = pneg %p59
        $region50: #{tpu_custom_call.1} parent=47 // pred_check_branch
          %319 = sbr.rel (%p317) target = $region52
        $region51: #{tpu_custom_call.1} parent=47 // pred_region
          %321 = dma.done %s313, 4096
        $region52: #{tpu_custom_call.1} parent=47 // pred_fallthru
          _
        // Predicated region
        $region53: #{tpu_custom_call.1} parent=47 // pred_check
          %p322 = pneg %p80
        $region54: #{tpu_custom_call.1} parent=47 // pred_check_branch
          %324 = sbr.rel (%p322) target = $region56
        $region55: #{tpu_custom_call.1} parent=47 // pred_region
          %326 = dma.done [#allocation7], 1024
        $region56: #{tpu_custom_call.1} parent=47 // pred_fallthru
          _
        // Predicated region
        $region57: #{tpu_custom_call.1} parent=47 // pred_check
          %p327 = pneg %p122
        $region58: #{tpu_custom_call.1} parent=47 // pred_check_branch
          %329 = sbr.rel (%p327) target = $region60
        $region59: #{tpu_custom_call.1} parent=47 // pred_region
          %331 = dma.done [#allocation7], 192
        $region60: #{tpu_custom_call.1} parent=47 // pred_fallthru
          _
        // Predicated region
        $region61: #{tpu_custom_call.1} parent=47 // pred_check
          %p332 = pneg %p164
        $region62: #{tpu_custom_call.1} parent=47 // pred_check_branch
          %334 = sbr.rel (%p332) target = $region64
        $region63: #{tpu_custom_call.1} parent=47 // pred_region
          %336 = dma.done [#allocation10], 1024
        $region64: #{tpu_custom_call.1} parent=47 // pred_fallthru
          _
        %s337 = sand.u32 %s46, 1
        %s338 = scalar_lea.sflag [#allocation4], %s337
        %s339 = sand.u32 %s46, 1
        %s340 = smul.addr %s339, 256
        %s341 = scalar_lea.vmem [#allocation3], %s340
        %p342 = pneg %p59
        %p343 = pneg %p56
        %p344 = pneg %p80
        %p345 = pneg %p77
        %p346 = pneg %p101
        %p347 = pneg %p98
        %p348 = pneg %p122
        %p349 = pneg %p119
        %p350 = pneg %p143
        %p351 = pneg %p140
        %p352 = pneg %p164
        %p353 = pneg %p161
        %p354 = pneg %p185
        %p355 = pneg %p182
        %p356 = pneg %p213
        %p357 = pneg %p210
        %s358 = sand.u32 %s200, 1
        %s359 = scalar_lea.sflag [#allocation5], %s358
        %s360 = sand.u32 %s200, 1
        %s361 = smul.addr %s360, 128
        %s362 = scalar_lea.vmem [#allocation11], %s361
        %s363 = smul.u32 8, %s31
        %p364 = scmp.eq.s32.totalorder %s31, 0
        // Predicated region
        $region65: #{tpu_custom_call.1} parent=47 // pred_check
          %p365 = pneg %p364
        $region66: #{tpu_custom_call.1} parent=47 // pred_check_branch
          %367 = sbr.rel (%p365) target = $region68
        $region67: #{tpu_custom_call.1} parent=47 // pred_region
          %368 = vst [vmem:[#allocation2] sm:$0xff] 0.0
          %369 = vst [vmem:[#allocation2 + $0x8] sm:$0xff] 0.0
          %370 = vst [vmem:[#allocation2 + $0x10] sm:$0x3] 0.0
          %371 = vst [vmem:[#allocation2 + $0x18] sm:$0xff] 0.0
          %372 = vst [vmem:[#allocation2 + $0x20] sm:$0xff] 0.0
          %373 = vst [vmem:[#allocation2 + $0x28] sm:$0x3] 0.0
          %374 = vst [vmem:[#allocation2 + $0x30] sm:$0xff] 0.0
          %375 = vst [vmem:[#allocation2 + $0x38] sm:$0xff] 0.0
          %376 = vst [vmem:[#allocation2 + $0x40] sm:$0x3] 0.0
          %377 = vst [vmem:[#allocation2 + $0x48] sm:$0xff] 0.0
          %378 = vst [vmem:[#allocation2 + $0x50] sm:$0xff] 0.0
          %379 = vst [vmem:[#allocation2 + $0x58] sm:$0x3] 0.0
          %380 = vst [vmem:[#allocation2 + $0x60] sm:$0xff] 0.0
          %381 = vst [vmem:[#allocation2 + $0x68] sm:$0xff] 0.0
          %382 = vst [vmem:[#allocation2 + $0x70] sm:$0x3] 0.0
          %383 = vst [vmem:[#allocation2 + $0x78] sm:$0xff] 0.0
          %384 = vst [vmem:[#allocation2 + $0x80] sm:$0xff] 0.0
          %385 = vst [vmem:[#allocation2 + $0x88] sm:$0x3] 0.0
          %386 = vst [vmem:[#allocation2 + $0x90] sm:$0xff] 0.0
          %387 = vst [vmem:[#allocation2 + $0x98] sm:$0xff] 0.0
          %388 = vst [vmem:[#allocation2 + $0xa0] sm:$0x3] 0.0
          %389 = vst [vmem:[#allocation2 + $0xa8] sm:$0xff] 0.0
          %390 = vst [vmem:[#allocation2 + $0xb0] sm:$0xff] 0.0
          %391 = vst [vmem:[#allocation2 + $0xb8] sm:$0x3] 0.0
          %392 = vst [vmem:[#allocation2 + $0xc0] sm:$0xff] 0.0
          %393 = vst [vmem:[#allocation2 + $0xc8] sm:$0xff] 0.0
          %394 = vst [vmem:[#allocation2 + $0xd0] sm:$0x3] 0.0
          %395 = vst [vmem:[#allocation2 + $0xd8] sm:$0xff] 0.0
          %396 = vst [vmem:[#allocation2 + $0xe0] sm:$0xff] 0.0
          %397 = vst [vmem:[#allocation2 + $0xe8] sm:$0x3] 0.0
          %398 = vst [vmem:[#allocation2 + $0xf0] sm:$0xff] 0.0
          %399 = vst [vmem:[#allocation2 + $0xf8] sm:$0xff] 0.0
          %400 = vst [vmem:[#allocation2 + $0x100] sm:$0x3] 0.0
          %401 = vst [vmem:[#allocation2 + $0x108] sm:$0xff] 0.0
          %402 = vst [vmem:[#allocation2 + $0x110] sm:$0xff] 0.0
          %403 = vst [vmem:[#allocation2 + $0x118] sm:$0x3] 0.0
          %404 = vst [vmem:[#allocation2 + $0x120] sm:$0xff] 0.0
          %405 = vst [vmem:[#allocation2 + $0x128] sm:$0xff] 0.0
          %406 = vst [vmem:[#allocation2 + $0x130] sm:$0x3] 0.0
          %407 = vst [vmem:[#allocation2 + $0x138] sm:$0xff] 0.0
          %408 = vst [vmem:[#allocation2 + $0x140] sm:$0xff] 0.0
          %409 = vst [vmem:[#allocation2 + $0x148] sm:$0x3] 0.0
          %410 = vst [vmem:[#allocation2 + $0x150] sm:$0xff] 0.0
          %411 = vst [vmem:[#allocation2 + $0x158] sm:$0xff] 0.0
          %412 = vst [vmem:[#allocation2 + $0x160] sm:$0x3] 0.0
          %413 = vst [vmem:[#allocation2 + $0x168] sm:$0xff] 0.0
          %414 = vst [vmem:[#allocation2 + $0x170] sm:$0xff] 0.0
          %415 = vst [vmem:[#allocation2 + $0x178] sm:$0x3] 0.0
          %416 = vst [vmem:[#allocation2 + $0x180] sm:$0xff] 0.0
          %417 = vst [vmem:[#allocation2 + $0x188] sm:$0xff] 0.0
          %418 = vst [vmem:[#allocation2 + $0x190] sm:$0x3] 0.0
          %419 = vst [vmem:[#allocation2 + $0x198] sm:$0xff] 0.0
          %420 = vst [vmem:[#allocation2 + $0x1a0] sm:$0xff] 0.0
          %421 = vst [vmem:[#allocation2 + $0x1a8] sm:$0x3] 0.0
          %v422 = vld [vmem:[%s316] sm:$0xff]
          %v423 = vld [vmem:[%s316 + $0x8] sm:$0xff]
          %v424 = vld [vmem:[%s316 + $0x10] sm:$0xff]
          %v425 = vld [vmem:[%s316 + $0x18] sm:$0xff]
          %v426 = vld [vmem:[%s316 + $0x20] sm:$0xff]
          %v427 = vld [vmem:[%s316 + $0x28] sm:$0xff]
          %v428 = vld [vmem:[%s316 + $0x30] sm:$0xff]
          %v429 = vld [vmem:[%s316 + $0x38] sm:$0xff]
          %v430 = vld [vmem:[%s316 + $0x40] sm:$0xff]
          %v431 = vld [vmem:[%s316 + $0x48] sm:$0xff]
          %v432 = vld [vmem:[%s316 + $0x50] sm:$0xff]
          %v433 = vld [vmem:[%s316 + $0x58] sm:$0xff]
          %v434 = vld [vmem:[%s316 + $0x60] sm:$0xff]
          %v435 = vld [vmem:[%s316 + $0x68] sm:$0xff]
          %v436 = vld [vmem:[%s316 + $0x70] sm:$0xff]
          %v437 = vld [vmem:[%s316 + $0x78] sm:$0xff]
          %v438 = vld [vmem:[%s316 + $0x80] sm:$0xff]
          %v439 = vld [vmem:[%s316 + $0x88] sm:$0xff]
          %v440 = vld [vmem:[%s316 + $0x90] sm:$0xff]
          %v441 = vld [vmem:[%s316 + $0x98] sm:$0xff]
          %v442 = vld [vmem:[%s316 + $0xa0] sm:$0xff]
          %v443 = vld [vmem:[%s316 + $0xa8] sm:$0xff]
          %v444 = vld [vmem:[%s316 + $0xb0] sm:$0xff]
          %v445 = vld [vmem:[%s316 + $0xb8] sm:$0xff]
          %v446 = vld [vmem:[%s316 + $0xc0] sm:$0xff]
          %v447 = vld [vmem:[%s316 + $0xc8] sm:$0xff]
          %v448 = vld [vmem:[%s316 + $0xd0] sm:$0xff]
          %v449 = vld [vmem:[%s316 + $0xd8] sm:$0xff]
          %v450 = vld [vmem:[%s316 + $0xe0] sm:$0xff]
          %v451 = vld [vmem:[%s316 + $0xe8] sm:$0xff]
          %v452 = vld [vmem:[%s316 + $0xf0] sm:$0xff]
          %v453 = vld [vmem:[%s316 + $0xf8] sm:$0xff]
          %v454 = vpack.c.bf16 %v423, %v422
          %v455 = vpack.c.bf16 %v425, %v424
          %v456 = vpack.c.bf16 %v427, %v426
          %v457 = vpack.c.bf16 %v429, %v428
          %v458 = vpack.c.bf16 %v431, %v430
          %v459 = vpack.c.bf16 %v433, %v432
          %v460 = vpack.c.bf16 %v435, %v434
          %v461 = vpack.c.bf16 %v437, %v436
          %v462 = vpack.c.bf16 %v439, %v438
          %v463 = vpack.c.bf16 %v441, %v440
          %v464 = vpack.c.bf16 %v443, %v442
          %v465 = vpack.c.bf16 %v445, %v444
          %v466 = vpack.c.bf16 %v447, %v446
          %v467 = vpack.c.bf16 %v449, %v448
          %v468 = vpack.c.bf16 %v451, %v450
          %v469 = vpack.c.bf16 %v453, %v452
          %v470 = vld [vmem:[#allocation6] sm:$0xf]
          %v471 = vld [vmem:[#allocation6 + $0x4] sm:$0xf]
          %v472 = vld [vmem:[#allocation6 + $0x8] sm:$0xf]
          %v473 = vld [vmem:[#allocation6 + $0xc] sm:$0xf]
          %v474 = vld [vmem:[#allocation6 + $0x10] sm:$0xf]
          %v475 = vld [vmem:[#allocation6 + $0x14] sm:$0xf]
          %v476 = vld [vmem:[#allocation6 + $0x18] sm:$0xf]
          %v477 = vld [vmem:[#allocation6 + $0x1c] sm:$0xf]
          %v478 = vld [vmem:[#allocation6 + $0x20] sm:$0xf]
          %v479 = vld [vmem:[#allocation6 + $0x24] sm:$0xf]
          %v480 = vld [vmem:[#allocation6 + $0x28] sm:$0xf]
          %v481 = vld [vmem:[#allocation6 + $0x2c] sm:$0xf]
          %v482 = vld [vmem:[#allocation6 + $0x30] sm:$0xf]
          %v483 = vld [vmem:[#allocation6 + $0x34] sm:$0xf]
          %v484 = vld [vmem:[#allocation6 + $0x38] sm:$0xf]
          %v485 = vld [vmem:[#allocation6 + $0x3c] sm:$0xf]
          %v486 = vld [vmem:[%s2] sm:$0x1]
          %v488 = vperm.slane %v486, 0
          %v506 = vunpack.c.l.b16 %v470
          %v507 = vunpack.c.l.b16 %v471
          %v508 = vunpack.c.l.b16 %v472
          %v509 = vunpack.c.l.b16 %v473
          %v510 = vunpack.c.l.b16 %v474
          %v511 = vunpack.c.l.b16 %v475
          %v512 = vunpack.c.l.b16 %v476
          %v513 = vunpack.c.l.b16 %v477
          %v514 = vunpack.c.l.b16 %v478
          %v515 = vunpack.c.l.b16 %v479
          %v516 = vunpack.c.l.b16 %v480
          %v517 = vunpack.c.l.b16 %v481
          %v518 = vunpack.c.l.b16 %v482
          %v519 = vunpack.c.l.b16 %v483
          %v520 = vunpack.c.l.b16 %v484
          %v521 = vunpack.c.l.b16 %v485
          %v522 = vpack.c.b16 %v507, %v506
          %v523 = vpack.c.b16 %v509, %v508
          %v524 = vpack.c.b16 %v511, %v510
          %v525 = vpack.c.b16 %v513, %v512
          %v526 = vpack.c.b16 %v515, %v514
          %v527 = vpack.c.b16 %v517, %v516
          %v528 = vpack.c.b16 %v519, %v518
          %v529 = vpack.c.b16 %v521, %v520
          %538 = vmatpush.bf16.msra.mxu0 %v529
          %539 = vmatpush.bf16.msra.mxu0 %v528
          %540 = vmatpush.bf16.msra.mxu0 %v527
          %541 = vmatpush.bf16.msra.mxu0 %v526
          %542 = vmatpush.bf16.msra.mxu0 %v525
          %543 = vmatpush.bf16.msra.mxu0 %v524
          %544 = vmatpush.bf16.msra.mxu0 %v523
          %545 = vmatpush.bf16.msra.mxu0 %v522
          %546 = vmatmul.bf16.gmra.mxu0 %v454
          %v547 = vpop.f32.mrf.mxu0
          %v548 = vadd.f32 %v488, %v547
          %v549 = vpop.f32.mrf.mxu0
          %v550 = vadd.f32 %v488, %v549
          %551 = vmatmul.bf16.gmra.mxu0 %v455
          %v552 = vpop.f32.mrf.mxu0
          %v553 = vadd.f32 %v488, %v552
          %v554 = vpop.f32.mrf.mxu0
          %v555 = vadd.f32 %v488, %v554
          %556 = vmatmul.bf16.gmra.mxu0 %v456
          %v557 = vpop.f32.mrf.mxu0
          %v558 = vadd.f32 %v488, %v557
          %v559 = vpop.f32.mrf.mxu0
          %v560 = vadd.f32 %v488, %v559
          %561 = vmatmul.bf16.gmra.mxu0 %v457
          %v562 = vpop.f32.mrf.mxu0
          %v563 = vadd.f32 %v488, %v562
          %v564 = vpop.f32.mrf.mxu0
          %v565 = vadd.f32 %v488, %v564
          %566 = vmatmul.bf16.gmra.mxu0 %v458
          %v567 = vpop.f32.mrf.mxu0
          %v568 = vadd.f32 %v488, %v567
          %v569 = vpop.f32.mrf.mxu0
          %v570 = vadd.f32 %v488, %v569
          %571 = vmatmul.bf16.gmra.mxu0 %v459
          %v572 = vpop.f32.mrf.mxu0
          %v573 = vadd.f32 %v488, %v572
          %v574 = vpop.f32.mrf.mxu0
          %v575 = vadd.f32 %v488, %v574
          %576 = vmatmul.bf16.gmra.mxu0 %v460
          %v577 = vpop.f32.mrf.mxu0
          %v578 = vadd.f32 %v488, %v577
          %v579 = vpop.f32.mrf.mxu0
          %v580 = vadd.f32 %v488, %v579
          %581 = vmatmul.bf16.gmra.mxu0 %v461
          %v582 = vpop.f32.mrf.mxu0
          %v583 = vadd.f32 %v488, %v582
          %v584 = vpop.f32.mrf.mxu0
          %v585 = vadd.f32 %v488, %v584
          %586 = vmatmul.bf16.gmra.mxu0 %v462
          %v587 = vpop.f32.mrf.mxu0
          %v588 = vadd.f32 %v488, %v587
          %v589 = vpop.f32.mrf.mxu0
          %v590 = vadd.f32 %v488, %v589
          %591 = vmatmul.bf16.gmra.mxu0 %v463
          %v592 = vpop.f32.mrf.mxu0
          %v593 = vadd.f32 %v488, %v592
          %v594 = vpop.f32.mrf.mxu0
          %v595 = vadd.f32 %v488, %v594
          %596 = vmatmul.bf16.gmra.mxu0 %v464
          %v597 = vpop.f32.mrf.mxu0
          %v598 = vadd.f32 %v488, %v597
          %v599 = vpop.f32.mrf.mxu0
          %v600 = vadd.f32 %v488, %v599
          %601 = vmatmul.bf16.gmra.mxu0 %v465
          %v602 = vpop.f32.mrf.mxu0
          %v603 = vadd.f32 %v488, %v602
          %v604 = vpop.f32.mrf.mxu0
          %v605 = vadd.f32 %v488, %v604
          %606 = vmatmul.bf16.gmra.mxu0 %v466
          %v607 = vpop.f32.mrf.mxu0
          %v608 = vadd.f32 %v488, %v607
          %v609 = vpop.f32.mrf.mxu0
          %v610 = vadd.f32 %v488, %v609
          %611 = vmatmul.bf16.gmra.mxu0 %v467
          %v612 = vpop.f32.mrf.mxu0
          %v613 = vadd.f32 %v488, %v612
          %v614 = vpop.f32.mrf.mxu0
          %v615 = vadd.f32 %v488, %v614
          %616 = vmatmul.bf16.gmra.mxu0 %v468
          %v617 = vpop.f32.mrf.mxu0
          %v618 = vadd.f32 %v488, %v617
          %v619 = vpop.f32.mrf.mxu0
          %v620 = vadd.f32 %v488, %v619
          %621 = vmatmul.bf16.gmra.mxu0 %v469
          %v622 = vpop.f32.mrf.mxu0
          %v623 = vadd.f32 %v488, %v622
          %v624 = vpop.f32.mrf.mxu0
          %v625 = vadd.f32 %v488, %v624
          %626 = vdwg.mxu0
          %v627 = vmax.f32 %v548, 0.0
          %v628 = vmax.f32 %v550, 0.0
          %v629 = vmax.f32 %v553, 0.0
          %v630 = vmax.f32 %v555, 0.0
          %v631 = vmax.f32 %v558, 0.0
          %v632 = vmax.f32 %v560, 0.0
          %v633 = vmax.f32 %v563, 0.0
          %v634 = vmax.f32 %v565, 0.0
          %v635 = vmax.f32 %v568, 0.0
          %v636 = vmax.f32 %v570, 0.0
          %v637 = vmax.f32 %v573, 0.0
          %v638 = vmax.f32 %v575, 0.0
          %v639 = vmax.f32 %v578, 0.0
          %v640 = vmax.f32 %v580, 0.0
          %v641 = vmax.f32 %v583, 0.0
          %v642 = vmax.f32 %v585, 0.0
          %v643 = vmax.f32 %v588, 0.0
          %v644 = vmax.f32 %v590, 0.0
          %v645 = vmax.f32 %v593, 0.0
          %v646 = vmax.f32 %v595, 0.0
          %v647 = vmax.f32 %v598, 0.0
          %v648 = vmax.f32 %v600, 0.0
          %v649 = vmax.f32 %v603, 0.0
          %v650 = vmax.f32 %v605, 0.0
          %v651 = vmax.f32 %v608, 0.0
          %v652 = vmax.f32 %v610, 0.0
          %v653 = vmax.f32 %v613, 0.0
          %v654 = vmax.f32 %v615, 0.0
          %v655 = vmax.f32 %v618, 0.0
          %v656 = vmax.f32 %v620, 0.0
          %v657 = vmax.f32 %v623, 0.0
          %v658 = vmax.f32 %v625, 0.0
          %v659 = vmin.f32 %v627, 6.0
          %v660 = vmin.f32 %v628, 6.0
          %v661 = vmin.f32 %v629, 6.0
          %v662 = vmin.f32 %v630, 6.0
          %v663 = vmin.f32 %v631, 6.0
          %v664 = vmin.f32 %v632, 6.0
          %v665 = vmin.f32 %v633, 6.0
          %v666 = vmin.f32 %v634, 6.0
          %v667 = vmin.f32 %v635, 6.0
          %v668 = vmin.f32 %v636, 6.0
          %v669 = vmin.f32 %v637, 6.0
          %v670 = vmin.f32 %v638, 6.0
          %v671 = vmin.f32 %v639, 6.0
          %v672 = vmin.f32 %v640, 6.0
          %v673 = vmin.f32 %v641, 6.0
          %v674 = vmin.f32 %v642, 6.0
          %v675 = vmin.f32 %v643, 6.0
          %v676 = vmin.f32 %v644, 6.0
          %v677 = vmin.f32 %v645, 6.0
          %v678 = vmin.f32 %v646, 6.0
          %v679 = vmin.f32 %v647, 6.0
          %v680 = vmin.f32 %v648, 6.0
          %v681 = vmin.f32 %v649, 6.0
          %v682 = vmin.f32 %v650, 6.0
          %v683 = vmin.f32 %v651, 6.0
          %v684 = vmin.f32 %v652, 6.0
          %v685 = vmin.f32 %v653, 6.0
          %v686 = vmin.f32 %v654, 6.0
          %v687 = vmin.f32 %v655, 6.0
          %v688 = vmin.f32 %v656, 6.0
          %v689 = vmin.f32 %v657, 6.0
          %v690 = vmin.f32 %v658, 6.0
          %s691 = scalar_lea.vmem [#allocation2], 24
          %692 = vst [vmem:[%s691 + $0x1] sm:$0xff] %v659
          %693 = vst [vmem:[%s691 + $0x9] sm:$0xff] %v660
          %694 = vst [vmem:[%s691 + $0x19] sm:$0xff] %v661
          %695 = vst [vmem:[%s691 + $0x21] sm:$0xff] %v662
          %696 = vst [vmem:[%s691 + $0x31] sm:$0xff] %v663
          %697 = vst [vmem:[%s691 + $0x39] sm:$0xff] %v664
          %698 = vst [vmem:[%s691 + $0x49] sm:$0xff] %v665
          %699 = vst [vmem:[%s691 + $0x51] sm:$0xff] %v666
          %700 = vst [vmem:[%s691 + $0x61] sm:$0xff] %v667
          %701 = vst [vmem:[%s691 + $0x69] sm:$0xff] %v668
          %702 = vst [vmem:[%s691 + $0x79] sm:$0xff] %v669
          %703 = vst [vmem:[%s691 + $0x81] sm:$0xff] %v670
          %704 = vst [vmem:[%s691 + $0x91] sm:$0xff] %v671
          %705 = vst [vmem:[%s691 + $0x99] sm:$0xff] %v672
          %706 = vst [vmem:[%s691 + $0xa9] sm:$0xff] %v673
          %707 = vst [vmem:[%s691 + $0xb1] sm:$0xff] %v674
          %708 = vst [vmem:[%s691 + $0xc1] sm:$0xff] %v675
          %709 = vst [vmem:[%s691 + $0xc9] sm:$0xff] %v676
          %710 = vst [vmem:[%s691 + $0xd9] sm:$0xff] %v677
          %711 = vst [vmem:[%s691 + $0xe1] sm:$0xff] %v678
          %712 = vst [vmem:[%s691 + $0xf1] sm:$0xff] %v679
          %713 = vst [vmem:[%s691 + $0xf9] sm:$0xff] %v680
          %714 = vst [vmem:[%s691 + $0x109] sm:$0xff] %v681
          %715 = vst [vmem:[%s691 + $0x111] sm:$0xff] %v682
          %716 = vst [vmem:[%s691 + $0x121] sm:$0xff] %v683
          %717 = vst [vmem:[%s691 + $0x129] sm:$0xff] %v684
          %718 = vst [vmem:[%s691 + $0x139] sm:$0xff] %v685
          %719 = vst [vmem:[%s691 + $0x141] sm:$0xff] %v686
          %720 = vst [vmem:[%s691 + $0x151] sm:$0xff] %v687
          %721 = vst [vmem:[%s691 + $0x159] sm:$0xff] %v688
          %722 = vst [vmem:[%s691 + $0x169] sm:$0xff] %v689
          %723 = vst [vmem:[%s691 + $0x171] sm:$0xff] %v690
        $region68: #{tpu_custom_call.1} parent=47 // pred_fallthru
          _
        %s724 = smul.u32 %s31, 8
        %s725 = smul.u32 %s724, 24
        %s726 = scalar_lea.vmem [#allocation2], %s725
        %v727 = vld [vmem:[%s726] sm:$0xff]
        %v728 = vld [vmem:[%s726 + $0x8] sm:$0xff]
        %v729 = vld [vmem:[%s726 + $0x10] sm:$0x3]
        %v730 = vld [vmem:[%s726 + $0x18] sm:$0xff]
        %v731 = vld [vmem:[%s726 + $0x20] sm:$0xff]
        %v732 = vld [vmem:[%s726 + $0x28] sm:$0x3]
        %v733 = vld [vmem:[%s726 + $0x30] sm:$0xff]
        %v734 = vld [vmem:[%s726 + $0x38] sm:$0xff]
        %v735 = vld [vmem:[%s726 + $0x40] sm:$0x3]
        %v736 = vld [vmem:[%s726 + $0x48] sm:$0xff]
        %v737 = vld [vmem:[%s726 + $0x50] sm:$0xff]
        %v738 = vld [vmem:[%s726 + $0x58] sm:$0x3]
        %v739 = vld [vmem:[%s726 + $0x60] sm:$0xff]
        %v740 = vld [vmem:[%s726 + $0x68] sm:$0xff]
        %v741 = vld [vmem:[%s726 + $0x70] sm:$0x3]
        %v742 = vld [vmem:[%s726 + $0x78] sm:$0xff]
        %v743 = vld [vmem:[%s726 + $0x80] sm:$0xff]
        %v744 = vld [vmem:[%s726 + $0x88] sm:$0x3]
        %v745 = vld [vmem:[%s726 + $0x90] sm:$0xff]
        %v746 = vld [vmem:[%s726 + $0x98] sm:$0xff]
        %v747 = vld [vmem:[%s726 + $0xa0] sm:$0x3]
        %v748 = vld [vmem:[%s726 + $0xa8] sm:$0xff]
        %v749 = vld [vmem:[%s726 + $0xb0] sm:$0xff]
        %v750 = vld [vmem:[%s726 + $0xb8] sm:$0x3]
        %v751 = vld [vmem:[%s726 + $0xc0] sm:$0xff]
        %v752 = vld [vmem:[%s726 + $0xc8] sm:$0xff]
        %v753 = vld [vmem:[%s726 + $0xd0] sm:$0x3]
        %v754 = vld [vmem:[%s726 + $0xd8] sm:$0xff]
        %v755 = vld [vmem:[%s726 + $0xe0] sm:$0xff]
        %v756 = vld [vmem:[%s726 + $0xe8] sm:$0x3]
        %v757 = vld [vmem:[#allocation8] sm:$0x7]
        %v758 = vld [vmem:[#allocation8 + $0x4] sm:$0x7]
        %v759 = vld [vmem:[#allocation8 + $0x8] sm:$0x7]
        %v760 = vperm.slane %v757, 0
        %v761 = vmul.f32 %v727, %v760
        %v762 = vmul.f32 %v728, %v760
        %v763 = vmul.f32 %v730, %v760
        %v764 = vmul.f32 %v731, %v760
        %v765 = vmul.f32 %v733, %v760
        %v766 = vmul.f32 %v734, %v760
        %v767 = vmul.f32 %v736, %v760
        %v768 = vmul.f32 %v737, %v760
        %v769 = vmul.f32 %v739, %v760
        %v770 = vmul.f32 %v740, %v760
        %v771 = vmul.f32 %v742, %v760
        %v772 = vmul.f32 %v743, %v760
        %v773 = vmul.f32 %v745, %v760
        %v774 = vmul.f32 %v746, %v760
        %v775 = vmul.f32 %v748, %v760
        %v776 = vmul.f32 %v749, %v760
        %v777 = vadd.f32 %v761, 0.0
        %v778 = vadd.f32 %v762, 0.0
        %v779 = vadd.f32 %v763, 0.0
        %v780 = vadd.f32 %v764, 0.0
        %v781 = vadd.f32 %v765, 0.0
        %v782 = vadd.f32 %v766, 0.0
        %v783 = vadd.f32 %v767, 0.0
        %v784 = vadd.f32 %v768, 0.0
        %v785 = vadd.f32 %v769, 0.0
        %v786 = vadd.f32 %v770, 0.0
        %v787 = vadd.f32 %v771, 0.0
        %v788 = vadd.f32 %v772, 0.0
        %v789 = vadd.f32 %v773, 0.0
        %v790 = vadd.f32 %v774, 0.0
        %v791 = vadd.f32 %v775, 0.0
        %v792 = vadd.f32 %v776, 0.0
        %v793 = vperm.slane %v757, 1
        %v794 = vmul.f32 %v727, %v793
        %v795 = vmul.f32 %v728, %v793
        %v796 = vmul.f32 %v729, %v793
        %v797 = vmul.f32 %v730, %v793
        %v798 = vmul.f32 %v731, %v793
        %v799 = vmul.f32 %v732, %v793
        %v800 = vmul.f32 %v733, %v793
        %v801 = vmul.f32 %v734, %v793
        %v802 = vmul.f32 %v735, %v793
        %v803 = vmul.f32 %v736, %v793
        %v804 = vmul.f32 %v737, %v793
        %v805 = vmul.f32 %v738, %v793
        %v806 = vmul.f32 %v739, %v793
        %v807 = vmul.f32 %v740, %v793
        %v808 = vmul.f32 %v741, %v793
        %v809 = vmul.f32 %v742, %v793
        %v810 = vmul.f32 %v743, %v793
        %v811 = vmul.f32 %v744, %v793
        %v812 = vmul.f32 %v745, %v793
        %v813 = vmul.f32 %v746, %v793
        %v814 = vmul.f32 %v747, %v793
        %v815 = vmul.f32 %v748, %v793
        %v816 = vmul.f32 %v749, %v793
        %v817 = vmul.f32 %v750, %v793
        %vm842 = vcmask 1046528
        %v843 = vrot.slane %v794, 1
        %v844 = vrot.slane %v795, 1
        %v845 = vsel %vm842, %v843, %v844
        %v846 = vrot.slane %v796, 1
        %v847 = vsel %vm842, %v844, %v846
        %v848 = vrot.slane %v797, 1
        %v849 = vrot.slane %v798, 1
        %v850 = vsel %vm842, %v848, %v849
        %v851 = vrot.slane %v799, 1
        %v852 = vsel %vm842, %v849, %v851
        %v853 = vrot.slane %v800, 1
        %v854 = vrot.slane %v801, 1
        %v855 = vsel %vm842, %v853, %v854
        %v856 = vrot.slane %v802, 1
        %v857 = vsel %vm842, %v854, %v856
        %v858 = vrot.slane %v803, 1
        %v859 = vrot.slane %v804, 1
        %v860 = vsel %vm842, %v858, %v859
        %v861 = vrot.slane %v805, 1
        %v862 = vsel %vm842, %v859, %v861
        %v863 = vrot.slane %v806, 1
        %v864 = vrot.slane %v807, 1
        %v865 = vsel %vm842, %v863, %v864
        %v866 = vrot.slane %v808, 1
        %v867 = vsel %vm842, %v864, %v866
        %v868 = vrot.slane %v809, 1
        %v869 = vrot.slane %v810, 1
        %v870 = vsel %vm842, %v868, %v869
        %v871 = vrot.slane %v811, 1
        %v872 = vsel %vm842, %v869, %v871
        %v873 = vrot.slane %v812, 1
        %v874 = vrot.slane %v813, 1
        %v875 = vsel %vm842, %v873, %v874
        %v876 = vrot.slane %v814, 1
        %v877 = vsel %vm842, %v874, %v876
        %v878 = vrot.slane %v815, 1
        %v879 = vrot.slane %v816, 1
        %v880 = vsel %vm842, %v878, %v879
        %v881 = vrot.slane %v817, 1
        %v882 = vsel %vm842, %v879, %v881
        %v899 = vadd.f32 %v777, %v845
        %v900 = vadd.f32 %v778, %v847
        %v901 = vadd.f32 %v779, %v850
        %v902 = vadd.f32 %v780, %v852
        %v903 = vadd.f32 %v781, %v855
        %v904 = vadd.f32 %v782, %v857
        %v905 = vadd.f32 %v783, %v860
        %v906 = vadd.f32 %v784, %v862
        %v907 = vadd.f32 %v785, %v865
        %v908 = vadd.f32 %v786, %v867
        %v909 = vadd.f32 %v787, %v870
        %v910 = vadd.f32 %v788, %v872
        %v911 = vadd.f32 %v789, %v875
        %v912 = vadd.f32 %v790, %v877
        %v913 = vadd.f32 %v791, %v880
        %v914 = vadd.f32 %v792, %v882
        %v915 = vperm.slane %v757, 2
        %v916 = vmul.f32 %v727, %v915
        %v917 = vmul.f32 %v728, %v915
        %v918 = vmul.f32 %v729, %v915
        %v919 = vmul.f32 %v730, %v915
        %v920 = vmul.f32 %v731, %v915
        %v921 = vmul.f32 %v732, %v915
        %v922 = vmul.f32 %v733, %v915
        %v923 = vmul.f32 %v734, %v915
        %v924 = vmul.f32 %v735, %v915
        %v925 = vmul.f32 %v736, %v915
        %v926 = vmul.f32 %v737, %v915
        %v927 = vmul.f32 %v738, %v915
        %v928 = vmul.f32 %v739, %v915
        %v929 = vmul.f32 %v740, %v915
        %v930 = vmul.f32 %v741, %v915
        %v931 = vmul.f32 %v742, %v915
        %v932 = vmul.f32 %v743, %v915
        %v933 = vmul.f32 %v744, %v915
        %v934 = vmul.f32 %v745, %v915
        %v935 = vmul.f32 %v746, %v915
        %v936 = vmul.f32 %v747, %v915
        %v937 = vmul.f32 %v748, %v915
        %v938 = vmul.f32 %v749, %v915
        %v939 = vmul.f32 %v750, %v915
        %vm964 = vcmask 1045504
        %v965 = vrot.slane %v916, 2
        %v966 = vrot.slane %v917, 2
        %v967 = vsel %vm964, %v965, %v966
        %v968 = vrot.slane %v918, 2
        %v969 = vsel %vm964, %v966, %v968
        %v970 = vrot.slane %v919, 2
        %v971 = vrot.slane %v920, 2
        %v972 = vsel %vm964, %v970, %v971
        %v973 = vrot.slane %v921, 2
        %v974 = vsel %vm964, %v971, %v973
        %v975 = vrot.slane %v922, 2
        %v976 = vrot.slane %v923, 2
        %v977 = vsel %vm964, %v975, %v976
        %v978 = vrot.slane %v924, 2
        %v979 = vsel %vm964, %v976, %v978
        %v980 = vrot.slane %v925, 2
        %v981 = vrot.slane %v926, 2
        %v982 = vsel %vm964, %v980, %v981
        %v983 = vrot.slane %v927, 2
        %v984 = vsel %vm964, %v981, %v983
        %v985 = vrot.slane %v928, 2
        %v986 = vrot.slane %v929, 2
        %v987 = vsel %vm964, %v985, %v986
        %v988 = vrot.slane %v930, 2
        %v989 = vsel %vm964, %v986, %v988
        %v990 = vrot.slane %v931, 2
        %v991 = vrot.slane %v932, 2
        %v992 = vsel %vm964, %v990, %v991
        %v993 = vrot.slane %v933, 2
        %v994 = vsel %vm964, %v991, %v993
        %v995 = vrot.slane %v934, 2
        %v996 = vrot.slane %v935, 2
        %v997 = vsel %vm964, %v995, %v996
        %v998 = vrot.slane %v936, 2
        %v999 = vsel %vm964, %v996, %v998
        %v1000 = vrot.slane %v937, 2
        %v1001 = vrot.slane %v938, 2
        %v1002 = vsel %vm964, %v1000, %v1001
        %v1003 = vrot.slane %v939, 2
        %v1004 = vsel %vm964, %v1001, %v1003
        %v1021 = vadd.f32 %v899, %v967
        %v1022 = vadd.f32 %v900, %v969
        %v1023 = vadd.f32 %v901, %v972
        %v1024 = vadd.f32 %v902, %v974
        %v1025 = vadd.f32 %v903, %v977
        %v1026 = vadd.f32 %v904, %v979
        %v1027 = vadd.f32 %v905, %v982
        %v1028 = vadd.f32 %v906, %v984
        %v1029 = vadd.f32 %v907, %v987
        %v1030 = vadd.f32 %v908, %v989
        %v1031 = vadd.f32 %v909, %v992
        %v1032 = vadd.f32 %v910, %v994
        %v1033 = vadd.f32 %v911, %v997
        %v1034 = vadd.f32 %v912, %v999
        %v1035 = vadd.f32 %v913, %v1002
        %v1036 = vadd.f32 %v914, %v1004
        %v1037 = vperm.slane %v758, 0
        %v1038 = vmul.f32 %v730, %v1037
        %v1039 = vmul.f32 %v731, %v1037
        %v1040 = vmul.f32 %v733, %v1037
        %v1041 = vmul.f32 %v734, %v1037
        %v1042 = vmul.f32 %v736, %v1037
        %v1043 = vmul.f32 %v737, %v1037
        %v1044 = vmul.f32 %v739, %v1037
        %v1045 = vmul.f32 %v740, %v1037
        %v1046 = vmul.f32 %v742, %v1037
        %v1047 = vmul.f32 %v743, %v1037
        %v1048 = vmul.f32 %v745, %v1037
        %v1049 = vmul.f32 %v746, %v1037
        %v1050 = vmul.f32 %v748, %v1037
        %v1051 = vmul.f32 %v749, %v1037
        %v1052 = vmul.f32 %v751, %v1037
        %v1053 = vmul.f32 %v752, %v1037
        %v1054 = vadd.f32 %v1021, %v1038
        %v1055 = vadd.f32 %v1022, %v1039
        %v1056 = vadd.f32 %v1023, %v1040
        %v1057 = vadd.f32 %v1024, %v1041
        %v1058 = vadd.f32 %v1025, %v1042
        %v1059 = vadd.f32 %v1026, %v1043
        %v1060 = vadd.f32 %v1027, %v1044
        %v1061 = vadd.f32 %v1028, %v1045
        %v1062 = vadd.f32 %v1029, %v1046
        %v1063 = vadd.f32 %v1030, %v1047
        %v1064 = vadd.f32 %v1031, %v1048
        %v1065 = vadd.f32 %v1032, %v1049
        %v1066 = vadd.f32 %v1033, %v1050
        %v1067 = vadd.f32 %v1034, %v1051
        %v1068 = vadd.f32 %v1035, %v1052
        %v1069 = vadd.f32 %v1036, %v1053
        %v1070 = vperm.slane %v758, 1
        %v1071 = vmul.f32 %v730, %v1070
        %v1072 = vmul.f32 %v731, %v1070
        %v1073 = vmul.f32 %v732, %v1070
        %v1074 = vmul.f32 %v733, %v1070
        %v1075 = vmul.f32 %v734, %v1070
        %v1076 = vmul.f32 %v735, %v1070
        %v1077 = vmul.f32 %v736, %v1070
        %v1078 = vmul.f32 %v737, %v1070
        %v1079 = vmul.f32 %v738, %v1070
        %v1080 = vmul.f32 %v739, %v1070
        %v1081 = vmul.f32 %v740, %v1070
        %v1082 = vmul.f32 %v741, %v1070
        %v1083 = vmul.f32 %v742, %v1070
        %v1084 = vmul.f32 %v743, %v1070
        %v1085 = vmul.f32 %v744, %v1070
        %v1086 = vmul.f32 %v745, %v1070
        %v1087 = vmul.f32 %v746, %v1070
        %v1088 = vmul.f32 %v747, %v1070
        %v1089 = vmul.f32 %v748, %v1070
        %v1090 = vmul.f32 %v749, %v1070
        %v1091 = vmul.f32 %v750, %v1070
        %v1092 = vmul.f32 %v751, %v1070
        %v1093 = vmul.f32 %v752, %v1070
        %v1094 = vmul.f32 %v753, %v1070
        %v1119 = vrot.slane %v1071, 1
        %v1120 = vrot.slane %v1072, 1
        %v1121 = vsel %vm842, %v1119, %v1120
        %v1122 = vrot.slane %v1073, 1
        %v1123 = vsel %vm842, %v1120, %v1122
        %v1124 = vrot.slane %v1074, 1
        %v1125 = vrot.slane %v1075, 1
        %v1126 = vsel %vm842, %v1124, %v1125
        %v1127 = vrot.slane %v1076, 1
        %v1128 = vsel %vm842, %v1125, %v1127
        %v1129 = vrot.slane %v1077, 1
        %v1130 = vrot.slane %v1078, 1
        %v1131 = vsel %vm842, %v1129, %v1130
        %v1132 = vrot.slane %v1079, 1
        %v1133 = vsel %vm842, %v1130, %v1132
        %v1134 = vrot.slane %v1080, 1
        %v1135 = vrot.slane %v1081, 1
        %v1136 = vsel %vm842, %v1134, %v1135
        %v1137 = vrot.slane %v1082, 1
        %v1138 = vsel %vm842, %v1135, %v1137
        %v1139 = vrot.slane %v1083, 1
        %v1140 = vrot.slane %v1084, 1
        %v1141 = vsel %vm842, %v1139, %v1140
        %v1142 = vrot.slane %v1085, 1
        %v1143 = vsel %vm842, %v1140, %v1142
        %v1144 = vrot.slane %v1086, 1
        %v1145 = vrot.slane %v1087, 1
        %v1146 = vsel %vm842, %v1144, %v1145
        %v1147 = vrot.slane %v1088, 1
        %v1148 = vsel %vm842, %v1145, %v1147
        %v1149 = vrot.slane %v1089, 1
        %v1150 = vrot.slane %v1090, 1
        %v1151 = vsel %vm842, %v1149, %v1150
        %v1152 = vrot.slane %v1091, 1
        %v1153 = vsel %vm842, %v1150, %v1152
        %v1154 = vrot.slane %v1092, 1
        %v1155 = vrot.slane %v1093, 1
        %v1156 = vsel %vm842, %v1154, %v1155
        %v1157 = vrot.slane %v1094, 1
        %v1158 = vsel %vm842, %v1155, %v1157
        %v1175 = vadd.f32 %v1054, %v1121
        %v1176 = vadd.f32 %v1055, %v1123
        %v1177 = vadd.f32 %v1056, %v1126
        %v1178 = vadd.f32 %v1057, %v1128
        %v1179 = vadd.f32 %v1058, %v1131
        %v1180 = vadd.f32 %v1059, %v1133
        %v1181 = vadd.f32 %v1060, %v1136
        %v1182 = vadd.f32 %v1061, %v1138
        %v1183 = vadd.f32 %v1062, %v1141
        %v1184 = vadd.f32 %v1063, %v1143
        %v1185 = vadd.f32 %v1064, %v1146
        %v1186 = vadd.f32 %v1065, %v1148
        %v1187 = vadd.f32 %v1066, %v1151
        %v1188 = vadd.f32 %v1067, %v1153
        %v1189 = vadd.f32 %v1068, %v1156
        %v1190 = vadd.f32 %v1069, %v1158
        %v1191 = vperm.slane %v758, 2
        %v1192 = vmul.f32 %v730, %v1191
        %v1193 = vmul.f32 %v731, %v1191
        %v1194 = vmul.f32 %v732, %v1191
        %v1195 = vmul.f32 %v733, %v1191
        %v1196 = vmul.f32 %v734, %v1191
        %v1197 = vmul.f32 %v735, %v1191
        %v1198 = vmul.f32 %v736, %v1191
        %v1199 = vmul.f32 %v737, %v1191
        %v1200 = vmul.f32 %v738, %v1191
        %v1201 = vmul.f32 %v739, %v1191
        %v1202 = vmul.f32 %v740, %v1191
        %v1203 = vmul.f32 %v741, %v1191
        %v1204 = vmul.f32 %v742, %v1191
        %v1205 = vmul.f32 %v743, %v1191
        %v1206 = vmul.f32 %v744, %v1191
        %v1207 = vmul.f32 %v745, %v1191
        %v1208 = vmul.f32 %v746, %v1191
        %v1209 = vmul.f32 %v747, %v1191
        %v1210 = vmul.f32 %v748, %v1191
        %v1211 = vmul.f32 %v749, %v1191
        %v1212 = vmul.f32 %v750, %v1191
        %v1213 = vmul.f32 %v751, %v1191
        %v1214 = vmul.f32 %v752, %v1191
        %v1215 = vmul.f32 %v753, %v1191
        %v1240 = vrot.slane %v1192, 2
        %v1241 = vrot.slane %v1193, 2
        %v1242 = vsel %vm964, %v1240, %v1241
        %v1243 = vrot.slane %v1194, 2
        %v1244 = vsel %vm964, %v1241, %v1243
        %v1245 = vrot.slane %v1195, 2
        %v1246 = vrot.slane %v1196, 2
        %v1247 = vsel %vm964, %v1245, %v1246
        %v1248 = vrot.slane %v1197, 2
        %v1249 = vsel %vm964, %v1246, %v1248
        %v1250 = vrot.slane %v1198, 2
        %v1251 = vrot.slane %v1199, 2
        %v1252 = vsel %vm964, %v1250, %v1251
        %v1253 = vrot.slane %v1200, 2
        %v1254 = vsel %vm964, %v1251, %v1253
        %v1255 = vrot.slane %v1201, 2
        %v1256 = vrot.slane %v1202, 2
        %v1257 = vsel %vm964, %v1255, %v1256
        %v1258 = vrot.slane %v1203, 2
        %v1259 = vsel %vm964, %v1256, %v1258
        %v1260 = vrot.slane %v1204, 2
        %v1261 = vrot.slane %v1205, 2
        %v1262 = vsel %vm964, %v1260, %v1261
        %v1263 = vrot.slane %v1206, 2
        %v1264 = vsel %vm964, %v1261, %v1263
        %v1265 = vrot.slane %v1207, 2
        %v1266 = vrot.slane %v1208, 2
        %v1267 = vsel %vm964, %v1265, %v1266
        %v1268 = vrot.slane %v1209, 2
        %v1269 = vsel %vm964, %v1266, %v1268
        %v1270 = vrot.slane %v1210, 2
        %v1271 = vrot.slane %v1211, 2
        %v1272 = vsel %vm964, %v1270, %v1271
        %v1273 = vrot.slane %v1212, 2
        %v1274 = vsel %vm964, %v1271, %v1273
        %v1275 = vrot.slane %v1213, 2
        %v1276 = vrot.slane %v1214, 2
        %v1277 = vsel %vm964, %v1275, %v1276
        %v1278 = vrot.slane %v1215, 2
        %v1279 = vsel %vm964, %v1276, %v1278
        %v1296 = vadd.f32 %v1175, %v1242
        %v1297 = vadd.f32 %v1176, %v1244
        %v1298 = vadd.f32 %v1177, %v1247
        %v1299 = vadd.f32 %v1178, %v1249
        %v1300 = vadd.f32 %v1179, %v1252
        %v1301 = vadd.f32 %v1180, %v1254
        %v1302 = vadd.f32 %v1181, %v1257
        %v1303 = vadd.f32 %v1182, %v1259
        %v1304 = vadd.f32 %v1183, %v1262
        %v1305 = vadd.f32 %v1184, %v1264
        %v1306 = vadd.f32 %v1185, %v1267
        %v1307 = vadd.f32 %v1186, %v1269
        %v1308 = vadd.f32 %v1187, %v1272
        %v1309 = vadd.f32 %v1188, %v1274
        %v1310 = vadd.f32 %v1189, %v1277
        %v1311 = vadd.f32 %v1190, %v1279
        %v1312 = vperm.slane %v759, 0
        %v1313 = vmul.f32 %v733, %v1312
        %v1314 = vmul.f32 %v734, %v1312
        %v1315 = vmul.f32 %v736, %v1312
        %v1316 = vmul.f32 %v737, %v1312
        %v1317 = vmul.f32 %v739, %v1312
        %v1318 = vmul.f32 %v740, %v1312
        %v1319 = vmul.f32 %v742, %v1312
        %v1320 = vmul.f32 %v743, %v1312
        %v1321 = vmul.f32 %v745, %v1312
        %v1322 = vmul.f32 %v746, %v1312
        %v1323 = vmul.f32 %v748, %v1312
        %v1324 = vmul.f32 %v749, %v1312
        %v1325 = vmul.f32 %v751, %v1312
        %v1326 = vmul.f32 %v752, %v1312
        %v1327 = vmul.f32 %v754, %v1312
        %v1328 = vmul.f32 %v755, %v1312
        %v1329 = vadd.f32 %v1296, %v1313
        %v1330 = vadd.f32 %v1297, %v1314
        %v1331 = vadd.f32 %v1298, %v1315
        %v1332 = vadd.f32 %v1299, %v1316
        %v1333 = vadd.f32 %v1300, %v1317
        %v1334 = vadd.f32 %v1301, %v1318
        %v1335 = vadd.f32 %v1302, %v1319
        %v1336 = vadd.f32 %v1303, %v1320
        %v1337 = vadd.f32 %v1304, %v1321
        %v1338 = vadd.f32 %v1305, %v1322
        %v1339 = vadd.f32 %v1306, %v1323
        %v1340 = vadd.f32 %v1307, %v1324
        %v1341 = vadd.f32 %v1308, %v1325
        %v1342 = vadd.f32 %v1309, %v1326
        %v1343 = vadd.f32 %v1310, %v1327
        %v1344 = vadd.f32 %v1311, %v1328
        %v1345 = vperm.slane %v759, 1
        %v1346 = vmul.f32 %v733, %v1345
        %v1347 = vmul.f32 %v734, %v1345
        %v1348 = vmul.f32 %v735, %v1345
        %v1349 = vmul.f32 %v736, %v1345
        %v1350 = vmul.f32 %v737, %v1345
        %v1351 = vmul.f32 %v738, %v1345
        %v1352 = vmul.f32 %v739, %v1345
        %v1353 = vmul.f32 %v740, %v1345
        %v1354 = vmul.f32 %v741, %v1345
        %v1355 = vmul.f32 %v742, %v1345
        %v1356 = vmul.f32 %v743, %v1345
        %v1357 = vmul.f32 %v744, %v1345
        %v1358 = vmul.f32 %v745, %v1345
        %v1359 = vmul.f32 %v746, %v1345
        %v1360 = vmul.f32 %v747, %v1345
        %v1361 = vmul.f32 %v748, %v1345
        %v1362 = vmul.f32 %v749, %v1345
        %v1363 = vmul.f32 %v750, %v1345
        %v1364 = vmul.f32 %v751, %v1345
        %v1365 = vmul.f32 %v752, %v1345
        %v1366 = vmul.f32 %v753, %v1345
        %v1367 = vmul.f32 %v754, %v1345
        %v1368 = vmul.f32 %v755, %v1345
        %v1369 = vmul.f32 %v756, %v1345
        %v1394 = vrot.slane %v1346, 1
        %v1395 = vrot.slane %v1347, 1
        %v1396 = vsel %vm842, %v1394, %v1395
        %v1397 = vrot.slane %v1348, 1
        %v1398 = vsel %vm842, %v1395, %v1397
        %v1399 = vrot.slane %v1349, 1
        %v1400 = vrot.slane %v1350, 1
        %v1401 = vsel %vm842, %v1399, %v1400
        %v1402 = vrot.slane %v1351, 1
        %v1403 = vsel %vm842, %v1400, %v1402
        %v1404 = vrot.slane %v1352, 1
        %v1405 = vrot.slane %v1353, 1
        %v1406 = vsel %vm842, %v1404, %v1405
        %v1407 = vrot.slane %v1354, 1
        %v1408 = vsel %vm842, %v1405, %v1407
        %v1409 = vrot.slane %v1355, 1
        %v1410 = vrot.slane %v1356, 1
        %v1411 = vsel %vm842, %v1409, %v1410
        %v1412 = vrot.slane %v1357, 1
        %v1413 = vsel %vm842, %v1410, %v1412
        %v1414 = vrot.slane %v1358, 1
        %v1415 = vrot.slane %v1359, 1
        %v1416 = vsel %vm842, %v1414, %v1415
        %v1417 = vrot.slane %v1360, 1
        %v1418 = vsel %vm842, %v1415, %v1417
        %v1419 = vrot.slane %v1361, 1
        %v1420 = vrot.slane %v1362, 1
        %v1421 = vsel %vm842, %v1419, %v1420
        %v1422 = vrot.slane %v1363, 1
        %v1423 = vsel %vm842, %v1420, %v1422
        %v1424 = vrot.slane %v1364, 1
        %v1425 = vrot.slane %v1365, 1
        %v1426 = vsel %vm842, %v1424, %v1425
        %v1427 = vrot.slane %v1366, 1
        %v1428 = vsel %vm842, %v1425, %v1427
        %v1429 = vrot.slane %v1367, 1
        %v1430 = vrot.slane %v1368, 1
        %v1431 = vsel %vm842, %v1429, %v1430
        %v1432 = vrot.slane %v1369, 1
        %v1433 = vsel %vm842, %v1430, %v1432
        %v1450 = vadd.f32 %v1329, %v1396
        %v1451 = vadd.f32 %v1330, %v1398
        %v1452 = vadd.f32 %v1331, %v1401
        %v1453 = vadd.f32 %v1332, %v1403
        %v1454 = vadd.f32 %v1333, %v1406
        %v1455 = vadd.f32 %v1334, %v1408
        %v1456 = vadd.f32 %v1335, %v1411
        %v1457 = vadd.f32 %v1336, %v1413
        %v1458 = vadd.f32 %v1337, %v1416
        %v1459 = vadd.f32 %v1338, %v1418
        %v1460 = vadd.f32 %v1339, %v1421
        %v1461 = vadd.f32 %v1340, %v1423
        %v1462 = vadd.f32 %v1341, %v1426
        %v1463 = vadd.f32 %v1342, %v1428
        %v1464 = vadd.f32 %v1343, %v1431
        %v1465 = vadd.f32 %v1344, %v1433
        %v1466 = vperm.slane %v759, 2
        %v1467 = vmul.f32 %v733, %v1466
        %v1468 = vmul.f32 %v734, %v1466
        %v1469 = vmul.f32 %v735, %v1466
        %v1470 = vmul.f32 %v736, %v1466
        %v1471 = vmul.f32 %v737, %v1466
        %v1472 = vmul.f32 %v738, %v1466
        %v1473 = vmul.f32 %v739, %v1466
        %v1474 = vmul.f32 %v740, %v1466
        %v1475 = vmul.f32 %v741, %v1466
        %v1476 = vmul.f32 %v742, %v1466
        %v1477 = vmul.f32 %v743, %v1466
        %v1478 = vmul.f32 %v744, %v1466
        %v1479 = vmul.f32 %v745, %v1466
        %v1480 = vmul.f32 %v746, %v1466
        %v1481 = vmul.f32 %v747, %v1466
        %v1482 = vmul.f32 %v748, %v1466
        %v1483 = vmul.f32 %v749, %v1466
        %v1484 = vmul.f32 %v750, %v1466
        %v1485 = vmul.f32 %v751, %v1466
        %v1486 = vmul.f32 %v752, %v1466
        %v1487 = vmul.f32 %v753, %v1466
        %v1488 = vmul.f32 %v754, %v1466
        %v1489 = vmul.f32 %v755, %v1466
        %v1490 = vmul.f32 %v756, %v1466
        %v1515 = vrot.slane %v1467, 2
        %v1516 = vrot.slane %v1468, 2
        %v1517 = vsel %vm964, %v1515, %v1516
        %v1518 = vrot.slane %v1469, 2
        %v1519 = vsel %vm964, %v1516, %v1518
        %v1520 = vrot.slane %v1470, 2
        %v1521 = vrot.slane %v1471, 2
        %v1522 = vsel %vm964, %v1520, %v1521
        %v1523 = vrot.slane %v1472, 2
        %v1524 = vsel %vm964, %v1521, %v1523
        %v1525 = vrot.slane %v1473, 2
        %v1526 = vrot.slane %v1474, 2
        %v1527 = vsel %vm964, %v1525, %v1526
        %v1528 = vrot.slane %v1475, 2
        %v1529 = vsel %vm964, %v1526, %v1528
        %v1530 = vrot.slane %v1476, 2
        %v1531 = vrot.slane %v1477, 2
        %v1532 = vsel %vm964, %v1530, %v1531
        %v1533 = vrot.slane %v1478, 2
        %v1534 = vsel %vm964, %v1531, %v1533
        %v1535 = vrot.slane %v1479, 2
        %v1536 = vrot.slane %v1480, 2
        %v1537 = vsel %vm964, %v1535, %v1536
        %v1538 = vrot.slane %v1481, 2
        %v1539 = vsel %vm964, %v1536, %v1538
        %v1540 = vrot.slane %v1482, 2
        %v1541 = vrot.slane %v1483, 2
        %v1542 = vsel %vm964, %v1540, %v1541
        %v1543 = vrot.slane %v1484, 2
        %v1544 = vsel %vm964, %v1541, %v1543
        %v1545 = vrot.slane %v1485, 2
        %v1546 = vrot.slane %v1486, 2
        %v1547 = vsel %vm964, %v1545, %v1546
        %v1548 = vrot.slane %v1487, 2
        %v1549 = vsel %vm964, %v1546, %v1548
        %v1550 = vrot.slane %v1488, 2
        %v1551 = vrot.slane %v1489, 2
        %v1552 = vsel %vm964, %v1550, %v1551
        %v1553 = vrot.slane %v1490, 2
        %v1554 = vsel %vm964, %v1551, %v1553
        %v1571 = vadd.f32 %v1450, %v1517
        %v1572 = vadd.f32 %v1451, %v1519
        %v1573 = vadd.f32 %v1452, %v1522
        %v1574 = vadd.f32 %v1453, %v1524
        %v1575 = vadd.f32 %v1454, %v1527
        %v1576 = vadd.f32 %v1455, %v1529
        %v1577 = vadd.f32 %v1456, %v1532
        %v1578 = vadd.f32 %v1457, %v1534
        %v1579 = vadd.f32 %v1458, %v1537
        %v1580 = vadd.f32 %v1459, %v1539
        %v1581 = vadd.f32 %v1460, %v1542
        %v1582 = vadd.f32 %v1461, %v1544
        %v1583 = vadd.f32 %v1462, %v1547
        %v1584 = vadd.f32 %v1463, %v1549
        %v1585 = vadd.f32 %v1464, %v1552
        %v1586 = vadd.f32 %v1465, %v1554
        %v1587 = vld [vmem:[%s4] sm:$0x1]
        %v1589 = vperm.slane %v1587, 0
        %v1591 = vadd.f32 %v1571, %v1589
        %v1592 = vadd.f32 %v1572, %v1589
        %v1593 = vadd.f32 %v1573, %v1589
        %v1594 = vadd.f32 %v1574, %v1589
        %v1595 = vadd.f32 %v1575, %v1589
        %v1596 = vadd.f32 %v1576, %v1589
        %v1597 = vadd.f32 %v1577, %v1589
        %v1598 = vadd.f32 %v1578, %v1589
        %v1599 = vadd.f32 %v1579, %v1589
        %v1600 = vadd.f32 %v1580, %v1589
        %v1601 = vadd.f32 %v1581, %v1589
        %v1602 = vadd.f32 %v1582, %v1589
        %v1603 = vadd.f32 %v1583, %v1589
        %v1604 = vadd.f32 %v1584, %v1589
        %v1605 = vadd.f32 %v1585, %v1589
        %v1606 = vadd.f32 %v1586, %v1589
        %v1607 = vmax.f32 %v1591, 0.0
        %v1608 = vmax.f32 %v1592, 0.0
        %v1609 = vmax.f32 %v1593, 0.0
        %v1610 = vmax.f32 %v1594, 0.0
        %v1611 = vmax.f32 %v1595, 0.0
        %v1612 = vmax.f32 %v1596, 0.0
        %v1613 = vmax.f32 %v1597, 0.0
        %v1614 = vmax.f32 %v1598, 0.0
        %v1615 = vmax.f32 %v1599, 0.0
        %v1616 = vmax.f32 %v1600, 0.0
        %v1617 = vmax.f32 %v1601, 0.0
        %v1618 = vmax.f32 %v1602, 0.0
        %v1619 = vmax.f32 %v1603, 0.0
        %v1620 = vmax.f32 %v1604, 0.0
        %v1621 = vmax.f32 %v1605, 0.0
        %v1622 = vmax.f32 %v1606, 0.0
        %v1623 = vmin.f32 %v1607, 6.0
        %v1624 = vmin.f32 %v1608, 6.0
        %v1625 = vmin.f32 %v1609, 6.0
        %v1626 = vmin.f32 %v1610, 6.0
        %v1627 = vmin.f32 %v1611, 6.0
        %v1628 = vmin.f32 %v1612, 6.0
        %v1629 = vmin.f32 %v1613, 6.0
        %v1630 = vmin.f32 %v1614, 6.0
        %v1631 = vmin.f32 %v1615, 6.0
        %v1632 = vmin.f32 %v1616, 6.0
        %v1633 = vmin.f32 %v1617, 6.0
        %v1634 = vmin.f32 %v1618, 6.0
        %v1635 = vmin.f32 %v1619, 6.0
        %v1636 = vmin.f32 %v1620, 6.0
        %v1637 = vmin.f32 %v1621, 6.0
        %v1638 = vmin.f32 %v1622, 6.0
        %v1639 = vpack.c.bf16 %v1624, %v1623
        %v1640 = vpack.c.bf16 %v1626, %v1625
        %v1641 = vpack.c.bf16 %v1628, %v1627
        %v1642 = vpack.c.bf16 %v1630, %v1629
        %v1643 = vpack.c.bf16 %v1632, %v1631
        %v1644 = vpack.c.bf16 %v1634, %v1633
        %v1645 = vpack.c.bf16 %v1636, %v1635
        %v1646 = vpack.c.bf16 %v1638, %v1637
        %v1647 = vld [vmem:[#allocation9] sm:$0xf]
        %v1648 = vld [vmem:[#allocation9 + $0x4] sm:$0xf]
        %v1649 = vld [vmem:[#allocation9 + $0x8] sm:$0xf]
        %v1650 = vld [vmem:[#allocation9 + $0xc] sm:$0xf]
        %v1651 = vld [vmem:[#allocation9 + $0x10] sm:$0xf]
        %v1652 = vld [vmem:[#allocation9 + $0x14] sm:$0xf]
        %v1653 = vld [vmem:[#allocation9 + $0x18] sm:$0xf]
        %v1654 = vld [vmem:[#allocation9 + $0x1c] sm:$0xf]
        %v1655 = vld [vmem:[#allocation9 + $0x20] sm:$0xf]
        %v1656 = vld [vmem:[#allocation9 + $0x24] sm:$0xf]
        %v1657 = vld [vmem:[#allocation9 + $0x28] sm:$0xf]
        %v1658 = vld [vmem:[#allocation9 + $0x2c] sm:$0xf]
        %v1659 = vld [vmem:[#allocation9 + $0x30] sm:$0xf]
        %v1660 = vld [vmem:[#allocation9 + $0x34] sm:$0xf]
        %v1661 = vld [vmem:[#allocation9 + $0x38] sm:$0xf]
        %v1662 = vld [vmem:[#allocation9 + $0x3c] sm:$0xf]
        %v1663 = vld [vmem:[%s6] sm:$0x1]
        %v1665 = vperm.slane %v1663, 0
        %v1683 = vunpack.c.l.b16 %v1647
        %v1684 = vunpack.c.l.b16 %v1648
        %v1685 = vunpack.c.l.b16 %v1649
        %v1686 = vunpack.c.l.b16 %v1650
        %v1687 = vunpack.c.l.b16 %v1651
        %v1688 = vunpack.c.l.b16 %v1652
        %v1689 = vunpack.c.l.b16 %v1653
        %v1690 = vunpack.c.l.b16 %v1654
        %v1691 = vunpack.c.l.b16 %v1655
        %v1692 = vunpack.c.l.b16 %v1656
        %v1693 = vunpack.c.l.b16 %v1657
        %v1694 = vunpack.c.l.b16 %v1658
        %v1695 = vunpack.c.l.b16 %v1659
        %v1696 = vunpack.c.l.b16 %v1660
        %v1697 = vunpack.c.l.b16 %v1661
        %v1698 = vunpack.c.l.b16 %v1662
        %v1699 = vpack.c.b16 %v1684, %v1683
        %v1700 = vpack.c.b16 %v1686, %v1685
        %v1701 = vpack.c.b16 %v1688, %v1687
        %v1702 = vpack.c.b16 %v1690, %v1689
        %v1703 = vpack.c.b16 %v1692, %v1691
        %v1704 = vpack.c.b16 %v1694, %v1693
        %v1705 = vpack.c.b16 %v1696, %v1695
        %v1706 = vpack.c.b16 %v1698, %v1697
        %1715 = vmatpush.bf16.msra.mxu0 %v1706
        %1716 = vmatpush.bf16.msra.mxu0 %v1705
        %1717 = vmatpush.bf16.msra.mxu0 %v1704
        %1718 = vmatpush.bf16.msra.mxu0 %v1703
        %1719 = vmatpush.bf16.msra.mxu0 %v1702
        %1720 = vmatpush.bf16.msra.mxu0 %v1701
        %1721 = vmatpush.bf16.msra.mxu0 %v1700
        %1722 = vmatpush.bf16.msra.mxu0 %v1699
        %1723 = vmatmul.bf16.gmra.mxu0 %v1639
        %v1724 = vpop.f32.mrf.mxu0
        %v1725 = vadd.f32 %v1665, %v1724
        %v1726 = vpop.f32.mrf.mxu0
        %v1727 = vadd.f32 %v1665, %v1726
        %1728 = vmatmul.bf16.gmra.mxu0 %v1640
        %v1729 = vpop.f32.mrf.mxu0
        %v1730 = vadd.f32 %v1665, %v1729
        %v1731 = vpop.f32.mrf.mxu0
        %v1732 = vadd.f32 %v1665, %v1731
        %1733 = vmatmul.bf16.gmra.mxu0 %v1641
        %v1734 = vpop.f32.mrf.mxu0
        %v1735 = vadd.f32 %v1665, %v1734
        %v1736 = vpop.f32.mrf.mxu0
        %v1737 = vadd.f32 %v1665, %v1736
        %1738 = vmatmul.bf16.gmra.mxu0 %v1642
        %v1739 = vpop.f32.mrf.mxu0
        %v1740 = vadd.f32 %v1665, %v1739
        %v1741 = vpop.f32.mrf.mxu0
        %v1742 = vadd.f32 %v1665, %v1741
        %1743 = vmatmul.bf16.gmra.mxu0 %v1643
        %v1744 = vpop.f32.mrf.mxu0
        %v1745 = vadd.f32 %v1665, %v1744
        %v1746 = vpop.f32.mrf.mxu0
        %v1747 = vadd.f32 %v1665, %v1746
        %1748 = vmatmul.bf16.gmra.mxu0 %v1644
        %v1749 = vpop.f32.mrf.mxu0
        %v1750 = vadd.f32 %v1665, %v1749
        %v1751 = vpop.f32.mrf.mxu0
        %v1752 = vadd.f32 %v1665, %v1751
        %1753 = vmatmul.bf16.gmra.mxu0 %v1645
        %v1754 = vpop.f32.mrf.mxu0
        %v1755 = vadd.f32 %v1665, %v1754
        %v1756 = vpop.f32.mrf.mxu0
        %v1757 = vadd.f32 %v1665, %v1756
        %1758 = vmatmul.bf16.gmra.mxu0 %v1646
        %v1759 = vpop.f32.mrf.mxu0
        %v1760 = vadd.f32 %v1665, %v1759
        %v1761 = vpop.f32.mrf.mxu0
        %v1762 = vadd.f32 %v1665, %v1761
        %1763 = vdwg.mxu0
        %s1764 = smul.u32 %s724, 16
        %s1765 = scalar_lea.vmem %s316, %s1764 [#allocation3]
        %v1766 = vld [vmem:[%s1765] sm:$0xff]
        %v1767 = vld [vmem:[%s1765 + $0x8] sm:$0xff]
        %v1768 = vld [vmem:[%s1765 + $0x10] sm:$0xff]
        %v1769 = vld [vmem:[%s1765 + $0x18] sm:$0xff]
        %v1770 = vld [vmem:[%s1765 + $0x20] sm:$0xff]
        %v1771 = vld [vmem:[%s1765 + $0x28] sm:$0xff]
        %v1772 = vld [vmem:[%s1765 + $0x30] sm:$0xff]
        %v1773 = vld [vmem:[%s1765 + $0x38] sm:$0xff]
        %v1774 = vld [vmem:[%s1765 + $0x40] sm:$0xff]
        %v1775 = vld [vmem:[%s1765 + $0x48] sm:$0xff]
        %v1776 = vld [vmem:[%s1765 + $0x50] sm:$0xff]
        %v1777 = vld [vmem:[%s1765 + $0x58] sm:$0xff]
        %v1778 = vld [vmem:[%s1765 + $0x60] sm:$0xff]
        %v1779 = vld [vmem:[%s1765 + $0x68] sm:$0xff]
        %v1780 = vld [vmem:[%s1765 + $0x70] sm:$0xff]
        %v1781 = vld [vmem:[%s1765 + $0x78] sm:$0xff]
        %v1782 = vadd.f32 %v1725, %v1766
        %v1783 = vadd.f32 %v1727, %v1767
        %v1784 = vadd.f32 %v1730, %v1768
        %v1785 = vadd.f32 %v1732, %v1769
        %v1786 = vadd.f32 %v1735, %v1770
        %v1787 = vadd.f32 %v1737, %v1771
        %v1788 = vadd.f32 %v1740, %v1772
        %v1789 = vadd.f32 %v1742, %v1773
        %v1790 = vadd.f32 %v1745, %v1774
        %v1791 = vadd.f32 %v1747, %v1775
        %v1792 = vadd.f32 %v1750, %v1776
        %v1793 = vadd.f32 %v1752, %v1777
        %v1794 = vadd.f32 %v1755, %v1778
        %v1795 = vadd.f32 %v1757, %v1779
        %v1796 = vadd.f32 %v1760, %v1780
        %v1797 = vadd.f32 %v1762, %v1781
        %1798 = vst [vmem:[%s362] sm:$0xff] %v1782
        %1799 = vst [vmem:[%s362 + $0x8] sm:$0xff] %v1783
        %1800 = vst [vmem:[%s362 + $0x10] sm:$0xff] %v1784
        %1801 = vst [vmem:[%s362 + $0x18] sm:$0xff] %v1785
        %1802 = vst [vmem:[%s362 + $0x20] sm:$0xff] %v1786
        %1803 = vst [vmem:[%s362 + $0x28] sm:$0xff] %v1787
        %1804 = vst [vmem:[%s362 + $0x30] sm:$0xff] %v1788
        %1805 = vst [vmem:[%s362 + $0x38] sm:$0xff] %v1789
        %1806 = vst [vmem:[%s362 + $0x40] sm:$0xff] %v1790
        %1807 = vst [vmem:[%s362 + $0x48] sm:$0xff] %v1791
        %1808 = vst [vmem:[%s362 + $0x50] sm:$0xff] %v1792
        %1809 = vst [vmem:[%s362 + $0x58] sm:$0xff] %v1793
        %1810 = vst [vmem:[%s362 + $0x60] sm:$0xff] %v1794
        %1811 = vst [vmem:[%s362 + $0x68] sm:$0xff] %v1795
        %1812 = vst [vmem:[%s362 + $0x70] sm:$0xff] %v1796
        %1813 = vst [vmem:[%s362 + $0x78] sm:$0xff] %v1797
        %s1814 = sand.u32 %s200, 1
        %s1815 = scalar_lea.sflag [#allocation5], %s1814
        %s1816 = sand.u32 %s200, 1
        %s1817 = smul.addr %s1816, 128
        %s1818 = scalar_lea.vmem [#allocation11], %s1817
        // Predicated region
        $region69: #{tpu_custom_call.1} parent=47 // pred_check
          %p1819 = pneg %p210
        $region70: #{tpu_custom_call.1} parent=47 // pred_check_branch
          %1821 = sbr.rel (%p1819) target = $region72
        $region71: #{tpu_custom_call.1} parent=47 // pred_region
          %s1822 = smul.u32 8, %s31
          %1824 = vsyncadd %s1815, 0
          %s1825 = smul.addr %s1822, 2
          %s1826 = smul.addr %s30, 32
          %s1827 = sadd.s32 %s1825, %s1826
          %s1828 = smul.addr %s1827, 8
          %s1829 = scalar_lea.hbm %s7, %s1828
          %s1830 = sshll.u32 %s1818, 4
          %s1831 = int_to_ptr.vmem [resolvable:$true] %s1830
          %s1832 = sshll.u32 %s1829, 4
          %s1833 = int_to_ptr.hbm [resolvable:$true] %s1832
          %1838 = dma.vmem_to_hbm [thread:$0]  %s1831, 2048, %s1833, %s1815, 128, 128, 8
        $region72: #{tpu_custom_call.1} parent=47 // pred_fallthru
          _
      $region48: #{tpu_custom_call.1} parent=5 // pred_fallthru
        _
      %p1839 = scmp.le.s32.totalorder 2, %s21
      // Predicated region
      $region73: #{tpu_custom_call.1} parent=5 // pred_check
        %p1840 = pneg %p1839
      $region74: #{tpu_custom_call.1} parent=5 // pred_check_branch
        %1842 = sbr.rel (%p1840) target = $region76
      $region75: #{tpu_custom_call.1} parent=5 // pred_region
        %s1843 = ssub.s32 %s21, 2
        // Predicated region
        $region77: #{tpu_custom_call.1} parent=75 // pred_check
          %p1844 = pneg %p216
        $region78: #{tpu_custom_call.1} parent=75 // pred_check_branch
          %1846 = sbr.rel (%p1844) target = $region80
        $region79: #{tpu_custom_call.1} parent=75 // pred_region
          %s1847 = sand.u32 %s201, 1
          %s1848 = scalar_lea.sflag [#allocation5], %s1847
          %s1849 = sand.u32 %s201, 1
          %s1850 = smul.addr %s1849, 128
          %s1851 = scalar_lea.vmem [#allocation11], %s1850
          %1853 = dma.done %s1848, 2048
        $region80: #{tpu_custom_call.1} parent=75 // pred_fallthru
          _
      $region76: #{tpu_custom_call.1} parent=5 // pred_fallthru
        _
    $region6: #{tpu_custom_call.1} parent=1 // loop_footer
      %s25 = sadd.s32 1, %s21
    $region7: #{tpu_custom_call.1} parent=1 // loop_footer_branch
      %20 = sbr.rel target = $region3
    $region8: #{tpu_custom_call.1} parent=1 // loop_exit
      _
    %1854 = vsyncpa [#allocation4], 1
    %s1855 = scalar_lea.sflag [#allocation4], 1
    %1856 = vsyncpa %s1855, 1
    %1857 = vsyncpa [#allocation7], 1
    %1858 = vsyncpa [#allocation10], 1
    %1859 = vsyncpa [#allocation5], 1
    %s1860 = scalar_lea.sflag [#allocation5], 1
    %1861 = vsyncpa %s1860, 1

</llo_original>
